<compile_context>
chip_gen: v7x
topology: tpu7x:2x2x1
jax: 0.10.0
libtpu: 0.0.40
codegen_flags: <defaults>
</compile_context>

<pallas_src>
import functools

import jax
import jax.numpy as jnp
from jax.experimental import pallas as pl
from jax.experimental.pallas import tpu as pltpu

EPS = 1e-5  # F.layer_norm default


def _round_up(v, m):
    return (v + m - 1) // m * m


def _ffn_layer_kernel(lens_ref, x_ref, w1_ref, b1_ref, w2_ref, b2_ref,
                      g_ref, bt_ref, out_ref, *, Tt, Tx, Th, C, K, PAD):
    # lens_ref: (B,) int32 in SMEM (scalar prefetch, prefix-mask lengths)
    # x_ref   : (1, T_pad, Cp) f32  -- whole padded sequence of this batch elem
    # w1_ref  : (K, Cp, Hp) bf16    b1_ref: (1, Hp) f32
    # w2_ref  : (K, Hp, Cp) bf16    b2_ref: (1, Cp) f32
    # g_ref / bt_ref : (1, Cp) f32 LayerNorm gamma / beta (zero on padded ch.)
    # out_ref : (1, Tt, Cp) f32
    b = pl.program_id(0)
    t = pl.program_id(1)
    L = lens_ref[b]                       # valid length of this sequence
    base = t * Tt                         # global time index of output row 0

    # halo window for this tile: rows [base - 2*PAD, base + Tt + 2*PAD)
    start = pl.multiple_of(t * Tt, 8)     # Tt is a multiple of 8
    x = x_ref[0, pl.ds(start, Tx), :]     # (Tx, Cp) f32
    Cp = x.shape[-1]

    # ---- per-row validity columns (rows, 1); broadcast in the multiplies ----
    rx = jax.lax.broadcasted_iota(jnp.int32, (Tx, 1), 0) + (base - 2 * PAD)
    xv = jnp.logical_and(rx >= 0, rx < L).astype(jnp.float32)
    rh = jax.lax.broadcasted_iota(jnp.int32, (Th, 1), 0) + (base - PAD)
    hv = jnp.logical_and(rh >= 0, rh < L).astype(jnp.float32)
    ro = jax.lax.broadcasted_iota(jnp.int32, (Tt, 1), 0) + base
    ov = (ro < L).astype(jnp.float32)     # base + r >= 0 always

    xm = (x * xv).astype(jnp.bfloat16)    # conv_1 input = x * x_mask

    # ---- conv_1: K per-tap MXU matmuls, f32 accumulation ----
    acc1 = jnp.dot(xm[0:Th, :], w1_ref[0], preferred_element_type=jnp.float32)
    for k in range(1, K):
        acc1 = acc1 + jnp.dot(xm[k:k + Th, :], w1_ref[k],
                              preferred_element_type=jnp.float32)
    h = jnp.maximum(acc1 + b1_ref[...], 0.0)        # bias + ReLU (f32)
    # drop() is identity in eval mode
    hm = (h * hv).astype(jnp.bfloat16)              # conv_2 input = h * x_mask

    # ---- conv_2 ----
    acc2 = jnp.dot(hm[0:Tt, :], w2_ref[0], preferred_element_type=jnp.float32)
    for k in range(1, K):
        acc2 = acc2 + jnp.dot(hm[k:k + Tt, :], w2_ref[k],
                              preferred_element_type=jnp.float32)
    y = (acc2 + b2_ref[...]) * ov                   # FFN returns y * x_mask

    # ---- residual + channel LayerNorm (two-pass variance) ----
    # Padded channels of x and y are exactly zero (zero-padded x_p, zero
    # w2 columns / b2 / gamma / beta); mean over Cp therefore equals mean
    # over the true C channels.
    z = x[2 * PAD:2 * PAD + Tt, :] + y              # raw (un-masked) residual
    inv_c = 1.0 / C
    mean = jnp.sum(z, axis=-1, keepdims=True) * inv_c
    d = z - mean
    if Cp != C:
        # zero padded channels so they do not contribute to the variance
        chv = (jax.lax.broadcasted_iota(jnp.int32, (1, Cp), 1) < C
               ).astype(jnp.float32)
        d = d * chv
    var = jnp.sum(d * d, axis=-1, keepdims=True) * inv_c
    zn = d * jax.lax.rsqrt(var + EPS) * g_ref[...] + bt_ref[...]
    out_ref[0] = (zn * ov).astype(out_ref.dtype)    # FFNLayer returns x * mask


def ffn_layer_pallas(x_ncl, mask_ncl, params, *, t_tile=248):
    """x_ncl: (B, C, T) f32, mask_ncl: (B, 1, T) prefix mask. Returns (B, C, T).

    Default t_tile=248 keeps Th = Tt + 2*PAD <= 256 for K=5 (one MXU M-pass on
    v6e/v7x). Note: the whole padded sequence of one batch element is held
    resident in VMEM (T_pad * Cp * 4 bytes, double-buffered across b).
    """
    w1, b1, w2, b2, gamma, beta = (params[k] for k in
                                   ("w1", "b1", "w2", "b2", "gamma", "beta"))
    B, C, T = x_ncl.shape
    H, _, K = w1.shape
    PAD = K // 2

    # ---- lane-dense channel padding, time tiling ----
    Cp = _round_up(C, 128)
    Hp = _round_up(H, 128)
    Tt = _round_up(min(t_tile, _round_up(T, 8)), 8)     # tile, multiple of 8
    nT = pl.cdiv(T, Tt)
    T_out = nT * Tt
    Tx = Tt + 4 * PAD                                   # x rows per tile
    Th = Tt + 2 * PAD                                   # hidden rows per tile
    T_pad = T_out + 4 * PAD

    # sequence lengths from the prefix mask (scalar prefetch -> SMEM)
    lens = jnp.sum(mask_ncl[:, 0, :], axis=-1).astype(jnp.int32)

    # x: NCL -> NTC, pad channels to Cp, pad time (front 2*PAD, back to T_pad)
    x_btc = jnp.transpose(x_ncl, (0, 2, 1))
    x_p = jnp.pad(x_btc, ((0, 0),
                          (2 * PAD, (T_out - T) + 2 * PAD),
                          (0, Cp - C)))                 # (B, T_pad, Cp)

    # per-tap weights (bf16), biases / LN params padded (f32)
    w1_k = jnp.pad(jnp.transpose(w1, (2, 1, 0)),        # (K, C, H)
                   ((0, 0), (0, Cp - C), (0, Hp - H))).astype(jnp.bfloat16)
    w2_k = jnp.pad(jnp.transpose(w2, (2, 1, 0)),        # (K, H, C)
                   ((0, 0), (0, Hp - H), (0, Cp - C))).astype(jnp.bfloat16)
    b1_p = jnp.pad(b1, (0, Hp - H)).reshape(1, Hp).astype(jnp.float32)
    b2_p = jnp.pad(b2, (0, Cp - C)).reshape(1, Cp).astype(jnp.float32)
    g_p = jnp.pad(gamma, (0, Cp - C)).reshape(1, Cp).astype(jnp.float32)
    bt_p = jnp.pad(beta, (0, Cp - C)).reshape(1, Cp).astype(jnp.float32)

    kernel = functools.partial(_ffn_layer_kernel,
                               Tt=Tt, Tx=Tx, Th=Th, C=C, K=K, PAD=PAD)
    # whole-array VMEM operands: resident once, not pipelined/double-buffered
    vmem_spec = pl.BlockSpec(memory_space=pltpu.MemorySpace.VMEM)

    # explicit VMEM budget (v7x default scoped limit is 32 MiB of 64 MiB phys)
    vmem_needed = (
        2 * T_pad * Cp * 4            # resident x block (double-buffered)
        + 2 * Tt * Cp * 4             # output block (double-buffered)
        + 2 * K * Cp * Hp * 2         # conv weights (bf16, single-buffered)
        + 2 * Th * Hp * 4             # conv_1 accumulator / relu temp (f32)
        + Tx * Cp * 2 + Th * Hp * 2   # bf16 matmul operands
        + 4 * Tt * Cp * 4             # conv_2 acc, residual, LN temps
        + (Hp + 3 * Cp) * 4 * 8       # biases / LN params (sublane-padded)
    )
    vmem_limit = int(min(110 * 2 ** 20, max(2 * vmem_needed, 24 * 2 ** 20)))

    out = pl.pallas_call(
        kernel,
        out_shape=jax.ShapeDtypeStruct((B, T_out, Cp), jnp.float32),
        grid_spec=pltpu.PrefetchScalarGridSpec(
            num_scalar_prefetch=1,
            grid=(B, nT),
            in_specs=[
                # constant in t -> the per-batch block is DMA'd once, reused
                pl.BlockSpec((1, T_pad, Cp), lambda b, t, lens: (b, 0, 0)),
                vmem_spec,   # w1  (K, Cp, Hp)
                vmem_spec,   # b1
                vmem_spec,   # w2  (K, Hp, Cp)
                vmem_spec,   # b2
                vmem_spec,   # gamma
                vmem_spec,   # beta
            ],
            out_specs=pl.BlockSpec((1, Tt, Cp), lambda b, t, lens: (b, t, 0)),
        ),
        compiler_params=pltpu.CompilerParams(
            dimension_semantics=("parallel", "parallel"),
            vmem_limit_bytes=vmem_limit),
    )(lens, x_p, w1_k, b1_p, w2_k, b2_p, g_p, bt_p)

    out = out[:, :T, :C]                          # drop time / channel padding
    return jnp.transpose(out, (0, 2, 1))          # back to (B, C, T)


# ---------------- pure-JAX reference (for correctness check) ----------------
def _conv1d_ref(x, w, b, pad):
    # mirror the kernel's bf16-operand / f32-accumulation matmuls
    xq = x.astype(jnp.bfloat16).astype(jnp.float32)
    wq = w.astype(jnp.bfloat16).astype(jnp.float32)
    y = jax.lax.conv_general_dilated(
        xq, wq, window_strides=(1,), padding=[(pad, pad)],
        dimension_numbers=("NCH", "OIH", "NCH"))
    return y + b[None, :, None]


def ffn_layer_ref(x, mask, params):
    w1, b1, w2, b2, gamma, beta = (params[k] for k in
                                   ("w1", "b1", "w2", "b2", "gamma", "beta"))
    K = w1.shape[2]
    pad = K // 2
    y = _conv1d_ref(x * mask, w1, b1, pad)
    y = jnp.maximum(y, 0.0)
    y = _conv1d_ref(y * mask, w2, b2, pad)
    y = y * mask
    z = x + y
    mean = jnp.mean(z, axis=1, keepdims=True)
    var = jnp.mean((z - mean) ** 2, axis=1, keepdims=True)
    zn = (z - mean) * jax.lax.rsqrt(var + EPS)
    zn = zn * gamma[None, :, None] + beta[None, :, None]
    return zn * mask


def _make_params(key, C, H, K):
    k_w1, k_b1, k_w2, k_b2, k_g, k_bt = jax.random.split(key, 6)
    return {
        "w1": 0.1 * jax.random.normal(k_w1, (H, C, K), jnp.float32),
        "b1": 0.1 * jax.random.normal(k_b1, (H,), jnp.float32),
        "w2": 0.1 * jax.random.normal(k_w2, (C, H, K), jnp.float32),
        "b2": 0.1 * jax.random.normal(k_b2, (C,), jnp.float32),
        "gamma": 1.0 + 0.1 * jax.random.normal(k_g, (C,), jnp.float32),
        "beta": 0.1 * jax.random.normal(k_bt, (C,), jnp.float32),
    }


def _run_case(key, B, C, T, K, scale, lens_list, t_tile):
    H = C * scale
    k_x, k_p = jax.random.split(key)
    x = jax.random.normal(k_x, (B, C, T), jnp.float32)
    lens = jnp.array(lens_list, jnp.int32)
    mask = (jnp.arange(T)[None, None, :] < lens[:, None, None]).astype(jnp.float32)
    params = _make_params(k_p, C, H, K)

    out = jax.block_until_ready(ffn_layer_pallas(x, mask, params, t_tile=t_tile))
    ref = jax.block_until_ready(ffn_layer_ref(x, mask, params))

    assert out.shape == (B, C, T)
    err = jnp.max(jnp.abs(out - ref))
    assert jnp.allclose(out, ref, atol=2e-2, rtol=2e-2), f"max err {err}"
    return err


if __name__ == "__main__":
    key = jax.random.PRNGKey(0)
    k1, k2 = jax.random.split(key)

    # small shapes consistent with the module (2 time tiles -> exercises the
    # in-kernel halo slice and valid-length masking on the second tile)
    _run_case(k1, B=2, C=4, T=16, K=5, scale=4, lens_list=[12, 16], t_tile=8)

    # production-like layout: lane-dense channels, multiple time tiles,
    # partial last tile (T_out > T) and a short sequence (L < T)
    _run_case(k2, B=2, C=128, T=160, K=5, scale=4, lens_list=[100, 160], t_tile=64)

    print("KERNEL_OK")
</pallas_src>

<mosaic_0001>
module attributes {stable_mosaic.version = 11 : i64} {
  func.func @_ffn_layer_kernel(%arg0: i32, %arg1: i32, %arg2: memref<2xi32, #tpu.memory_space<smem>>, %arg3: memref<1x24x128xf32, #tpu.memory_space<vmem>>, %arg4: memref<5x128x128xbf16, #tpu.memory_space<vmem>>, %arg5: memref<1x128xf32, #tpu.memory_space<vmem>>, %arg6: memref<5x128x128xbf16, #tpu.memory_space<vmem>>, %arg7: memref<1x128xf32, #tpu.memory_space<vmem>>, %arg8: memref<1x128xf32, #tpu.memory_space<vmem>>, %arg9: memref<1x128xf32, #tpu.memory_space<vmem>>, %arg10: memref<1x8x128xf32, #tpu.memory_space<vmem>>) attributes {dimension_semantics = [#tpu.dimension_semantics<parallel>, #tpu.dimension_semantics<parallel>], iteration_bounds = array<i64: 2, 2>, scalar_prefetch = 1 : i64, scratch_operands = 0 : i64, tpu.core_type = #tpu.core_type<tc>, window_params = [{transform_indices = @transform_0, window_bounds = array<i64: 1, 24, 128>}, {pipeline_mode = #tpu.pipeline_mode<synchronous>, transform_indices = @transform_1, window_bounds = array<i64: 5, 128, 128>}, {pipeline_mode = #tpu.pipeline_mode<synchronous>, transform_indices = @transform_2, window_bounds = array<i64: 1, 128>}, {pipeline_mode = #tpu.pipeline_mode<synchronous>, transform_indices = @transform_3, window_bounds = array<i64: 5, 128, 128>}, {pipeline_mode = #tpu.pipeline_mode<synchronous>, transform_indices = @transform_4, window_bounds = array<i64: 1, 128>}, {pipeline_mode = #tpu.pipeline_mode<synchronous>, transform_indices = @transform_5, window_bounds = array<i64: 1, 128>}, {pipeline_mode = #tpu.pipeline_mode<synchronous>, transform_indices = @transform_6, window_bounds = array<i64: 1, 128>}, {transform_indices = @transform_7, window_bounds = array<i64: 1, 8, 128>}]} {
    %0 = arith.index_cast %arg0 : i32 to index
    %1 = memref.load %arg2[%0] : memref<2xi32, #tpu.memory_space<smem>>
    %c8_i32 = arith.constant 8 : i32
    %2 = arith.muli %arg1, %c8_i32 : i32
    %c8_i32_0 = arith.constant 8 : i32
    %3 = arith.muli %arg1, %c8_i32_0 : i32
    %4 = tpu.assume_multiple %3, 8 : i32
    %c0 = arith.constant 0 : index
    %5 = arith.index_cast %4 : i32 to index
    %c0_1 = arith.constant 0 : index
    %6 = vector.load %arg3[%c0, %5, %c0_1] : memref<1x24x128xf32, #tpu.memory_space<vmem>>, vector<1x16x128xf32>
    %7 = vector.shape_cast %6 : vector<1x16x128xf32> to vector<16x128xf32>
    %8 = tpu.iota {dimensions = array<i32: 0>} : vector<16x1xi32>
    %c4_i32 = arith.constant 4 : i32
    %9 = arith.subi %2, %c4_i32 : i32
    %10 = vector.broadcast %9 : i32 to vector<16x1xi32>
    %11 = arith.addi %8, %10 : vector<16x1xi32>
    %c0_i32 = arith.constant 0 : i32
    %12 = vector.broadcast %c0_i32 : i32 to vector<16x1xi32>
    %13 = arith.cmpi sge, %11, %12 : vector<16x1xi32>
    %14 = vector.broadcast %1 : i32 to vector<16x1xi32>
    %15 = arith.cmpi slt, %11, %14 : vector<16x1xi32>
    %16 = arith.andi %13, %15 : vector<16x1xi1>
    %17 = arith.extui %16 : vector<16x1xi1> to vector<16x1xi32>
    %18 = arith.sitofp %17 : vector<16x1xi32> to vector<16x1xf32>
    %19 = tpu.iota {dimensions = array<i32: 0>} : vector<12x1xi32>
    %c2_i32 = arith.constant 2 : i32
    %20 = arith.subi %2, %c2_i32 : i32
    %21 = vector.broadcast %20 : i32 to vector<12x1xi32>
    %22 = arith.addi %19, %21 : vector<12x1xi32>
    %c0_i32_2 = arith.constant 0 : i32
    %23 = vector.broadcast %c0_i32_2 : i32 to vector<12x1xi32>
    %24 = arith.cmpi sge, %22, %23 : vector<12x1xi32>
    %25 = vector.broadcast %1 : i32 to vector<12x1xi32>
    %26 = arith.cmpi slt, %22, %25 : vector<12x1xi32>
    %27 = arith.andi %24, %26 : vector<12x1xi1>
    %28 = arith.extui %27 : vector<12x1xi1> to vector<12x1xi32>
    %29 = arith.sitofp %28 : vector<12x1xi32> to vector<12x1xf32>
    %30 = tpu.iota {dimensions = array<i32: 0>} : vector<8x1xi32>
    %31 = vector.broadcast %2 : i32 to vector<8x1xi32>
    %32 = arith.addi %30, %31 : vector<8x1xi32>
    %33 = vector.broadcast %1 : i32 to vector<8x1xi32>
    %34 = arith.cmpi slt, %32, %33 : vector<8x1xi32>
    %35 = arith.extui %34 : vector<8x1xi1> to vector<8x1xi32>
    %36 = arith.sitofp %35 : vector<8x1xi32> to vector<8x1xf32>
    %37 = vector.broadcast %18 : vector<16x1xf32> to vector<16x128xf32>
    %38 = arith.mulf %7, %37 : vector<16x128xf32>
    %39 = arith.truncf %38 : vector<16x128xf32> to vector<16x128xbf16>
    %40 = vector.extract_strided_slice %39 {offsets = [0, 0], sizes = [12, 128], strides = [1, 1]} : vector<16x128xbf16> to vector<12x128xbf16>
    %c0_3 = arith.constant 0 : index
    %c0_4 = arith.constant 0 : index
    %c0_5 = arith.constant 0 : index
    %41 = vector.load %arg4[%c0_3, %c0_4, %c0_5] : memref<5x128x128xbf16, #tpu.memory_space<vmem>>, vector<1x128x128xbf16>
    %42 = vector.shape_cast %41 : vector<1x128x128xbf16> to vector<128x128xbf16>
    %cst = arith.constant dense<0.000000e+00> : vector<12x128xf32>
    %43 = tpu.matmul %40, %42, %cst {dimension_numbers = #tpu.dot_dimension_numbers<[1], [0], [0], [1], [0, 0, 1, 1], [], []>} : vector<12x128xbf16>, vector<128x128xbf16>, vector<12x128xf32> -> vector<12x128xf32>
    %44 = vector.extract_strided_slice %39 {offsets = [1, 0], sizes = [12, 128], strides = [1, 1]} : vector<16x128xbf16> to vector<12x128xbf16>
    %c1 = arith.constant 1 : index
    %c0_6 = arith.constant 0 : index
    %c0_7 = arith.constant 0 : index
    %45 = vector.load %arg4[%c1, %c0_6, %c0_7] : memref<5x128x128xbf16, #tpu.memory_space<vmem>>, vector<1x128x128xbf16>
    %46 = vector.shape_cast %45 : vector<1x128x128xbf16> to vector<128x128xbf16>
    %cst_8 = arith.constant dense<0.000000e+00> : vector<12x128xf32>
    %47 = tpu.matmul %44, %46, %cst_8 {dimension_numbers = #tpu.dot_dimension_numbers<[1], [0], [0], [1], [0, 0, 1, 1], [], []>} : vector<12x128xbf16>, vector<128x128xbf16>, vector<12x128xf32> -> vector<12x128xf32>
    %48 = arith.addf %43, %47 : vector<12x128xf32>
    %49 = vector.extract_strided_slice %39 {offsets = [2, 0], sizes = [12, 128], strides = [1, 1]} : vector<16x128xbf16> to vector<12x128xbf16>
    %c2 = arith.constant 2 : index
    %c0_9 = arith.constant 0 : index
    %c0_10 = arith.constant 0 : index
    %50 = vector.load %arg4[%c2, %c0_9, %c0_10] : memref<5x128x128xbf16, #tpu.memory_space<vmem>>, vector<1x128x128xbf16>
    %51 = vector.shape_cast %50 : vector<1x128x128xbf16> to vector<128x128xbf16>
    %cst_11 = arith.constant dense<0.000000e+00> : vector<12x128xf32>
    %52 = tpu.matmul %49, %51, %cst_11 {dimension_numbers = #tpu.dot_dimension_numbers<[1], [0], [0], [1], [0, 0, 1, 1], [], []>} : vector<12x128xbf16>, vector<128x128xbf16>, vector<12x128xf32> -> vector<12x128xf32>
    %53 = arith.addf %48, %52 : vector<12x128xf32>
    %54 = vector.extract_strided_slice %39 {offsets = [3, 0], sizes = [12, 128], strides = [1, 1]} : vector<16x128xbf16> to vector<12x128xbf16>
    %c3 = arith.constant 3 : index
    %c0_12 = arith.constant 0 : index
    %c0_13 = arith.constant 0 : index
    %55 = vector.load %arg4[%c3, %c0_12, %c0_13] : memref<5x128x128xbf16, #tpu.memory_space<vmem>>, vector<1x128x128xbf16>
    %56 = vector.shape_cast %55 : vector<1x128x128xbf16> to vector<128x128xbf16>
    %cst_14 = arith.constant dense<0.000000e+00> : vector<12x128xf32>
    %57 = tpu.matmul %54, %56, %cst_14 {dimension_numbers = #tpu.dot_dimension_numbers<[1], [0], [0], [1], [0, 0, 1, 1], [], []>} : vector<12x128xbf16>, vector<128x128xbf16>, vector<12x128xf32> -> vector<12x128xf32>
    %58 = arith.addf %53, %57 : vector<12x128xf32>
    %59 = vector.extract_strided_slice %39 {offsets = [4, 0], sizes = [12, 128], strides = [1, 1]} : vector<16x128xbf16> to vector<12x128xbf16>
    %c4 = arith.constant 4 : index
    %c0_15 = arith.constant 0 : index
    %c0_16 = arith.constant 0 : index
    %60 = vector.load %arg4[%c4, %c0_15, %c0_16] : memref<5x128x128xbf16, #tpu.memory_space<vmem>>, vector<1x128x128xbf16>
    %61 = vector.shape_cast %60 : vector<1x128x128xbf16> to vector<128x128xbf16>
    %cst_17 = arith.constant dense<0.000000e+00> : vector<12x128xf32>
    %62 = tpu.matmul %59, %61, %cst_17 {dimension_numbers = #tpu.dot_dimension_numbers<[1], [0], [0], [1], [0, 0, 1, 1], [], []>} : vector<12x128xbf16>, vector<128x128xbf16>, vector<12x128xf32> -> vector<12x128xf32>
    %63 = arith.addf %58, %62 : vector<12x128xf32>
    %c0_18 = arith.constant 0 : index
    %c0_19 = arith.constant 0 : index
    %64 = vector.load %arg5[%c0_18, %c0_19] : memref<1x128xf32, #tpu.memory_space<vmem>>, vector<1x128xf32>
    %65 = vector.broadcast %64 : vector<1x128xf32> to vector<12x128xf32>
    %66 = arith.addf %63, %65 : vector<12x128xf32>
    %cst_20 = arith.constant 0.000000e+00 : f32
    %67 = vector.broadcast %cst_20 : f32 to vector<12x128xf32>
    %68 = arith.maximumf %66, %67 : vector<12x128xf32>
    %69 = vector.broadcast %29 : vector<12x1xf32> to vector<12x128xf32>
    %70 = arith.mulf %68, %69 : vector<12x128xf32>
    %71 = arith.truncf %70 : vector<12x128xf32> to vector<12x128xbf16>
    %72 = vector.extract_strided_slice %71 {offsets = [0, 0], sizes = [8, 128], strides = [1, 1]} : vector<12x128xbf16> to vector<8x128xbf16>
    %c0_21 = arith.constant 0 : index
    %c0_22 = arith.constant 0 : index
    %c0_23 = arith.constant 0 : index
    %73 = vector.load %arg6[%c0_21, %c0_22, %c0_23] : memref<5x128x128xbf16, #tpu.memory_space<vmem>>, vector<1x128x128xbf16>
    %74 = vector.shape_cast %73 : vector<1x128x128xbf16> to vector<128x128xbf16>
    %cst_24 = arith.constant dense<0.000000e+00> : vector<8x128xf32>
    %75 = tpu.matmul %72, %74, %cst_24 {dimension_numbers = #tpu.dot_dimension_numbers<[1], [0], [0], [1], [0, 0, 1, 1], [], []>} : vector<8x128xbf16>, vector<128x128xbf16>, vector<8x128xf32> -> vector<8x128xf32>
    %76 = vector.extract_strided_slice %71 {offsets = [1, 0], sizes = [8, 128], strides = [1, 1]} : vector<12x128xbf16> to vector<8x128xbf16>
    %c1_25 = arith.constant 1 : index
    %c0_26 = arith.constant 0 : index
    %c0_27 = arith.constant 0 : index
    %77 = vector.load %arg6[%c1_25, %c0_26, %c0_27] : memref<5x128x128xbf16, #tpu.memory_space<vmem>>, vector<1x128x128xbf16>
    %78 = vector.shape_cast %77 : vector<1x128x128xbf16> to vector<128x128xbf16>
    %cst_28 = arith.constant dense<0.000000e+00> : vector<8x128xf32>
    %79 = tpu.matmul %76, %78, %cst_28 {dimension_numbers = #tpu.dot_dimension_numbers<[1], [0], [0], [1], [0, 0, 1, 1], [], []>} : vector<8x128xbf16>, vector<128x128xbf16>, vector<8x128xf32> -> vector<8x128xf32>
    %80 = arith.addf %75, %79 : vector<8x128xf32>
    %81 = vector.extract_strided_slice %71 {offsets = [2, 0], sizes = [8, 128], strides = [1, 1]} : vector<12x128xbf16> to vector<8x128xbf16>
    %c2_29 = arith.constant 2 : index
    %c0_30 = arith.constant 0 : index
    %c0_31 = arith.constant 0 : index
    %82 = vector.load %arg6[%c2_29, %c0_30, %c0_31] : memref<5x128x128xbf16, #tpu.memory_space<vmem>>, vector<1x128x128xbf16>
    %83 = vector.shape_cast %82 : vector<1x128x128xbf16> to vector<128x128xbf16>
    %cst_32 = arith.constant dense<0.000000e+00> : vector<8x128xf32>
    %84 = tpu.matmul %81, %83, %cst_32 {dimension_numbers = #tpu.dot_dimension_numbers<[1], [0], [0], [1], [0, 0, 1, 1], [], []>} : vector<8x128xbf16>, vector<128x128xbf16>, vector<8x128xf32> -> vector<8x128xf32>
    %85 = arith.addf %80, %84 : vector<8x128xf32>
    %86 = vector.extract_strided_slice %71 {offsets = [3, 0], sizes = [8, 128], strides = [1, 1]} : vector<12x128xbf16> to vector<8x128xbf16>
    %c3_33 = arith.constant 3 : index
    %c0_34 = arith.constant 0 : index
    %c0_35 = arith.constant 0 : index
    %87 = vector.load %arg6[%c3_33, %c0_34, %c0_35] : memref<5x128x128xbf16, #tpu.memory_space<vmem>>, vector<1x128x128xbf16>
    %88 = vector.shape_cast %87 : vector<1x128x128xbf16> to vector<128x128xbf16>
    %cst_36 = arith.constant dense<0.000000e+00> : vector<8x128xf32>
    %89 = tpu.matmul %86, %88, %cst_36 {dimension_numbers = #tpu.dot_dimension_numbers<[1], [0], [0], [1], [0, 0, 1, 1], [], []>} : vector<8x128xbf16>, vector<128x128xbf16>, vector<8x128xf32> -> vector<8x128xf32>
    %90 = arith.addf %85, %89 : vector<8x128xf32>
    %91 = vector.extract_strided_slice %71 {offsets = [4, 0], sizes = [8, 128], strides = [1, 1]} : vector<12x128xbf16> to vector<8x128xbf16>
    %c4_37 = arith.constant 4 : index
    %c0_38 = arith.constant 0 : index
    %c0_39 = arith.constant 0 : index
    %92 = vector.load %arg6[%c4_37, %c0_38, %c0_39] : memref<5x128x128xbf16, #tpu.memory_space<vmem>>, vector<1x128x128xbf16>
    %93 = vector.shape_cast %92 : vector<1x128x128xbf16> to vector<128x128xbf16>
    %cst_40 = arith.constant dense<0.000000e+00> : vector<8x128xf32>
    %94 = tpu.matmul %91, %93, %cst_40 {dimension_numbers = #tpu.dot_dimension_numbers<[1], [0], [0], [1], [0, 0, 1, 1], [], []>} : vector<8x128xbf16>, vector<128x128xbf16>, vector<8x128xf32> -> vector<8x128xf32>
    %95 = arith.addf %90, %94 : vector<8x128xf32>
    %c0_41 = arith.constant 0 : index
    %c0_42 = arith.constant 0 : index
    %96 = vector.load %arg7[%c0_41, %c0_42] : memref<1x128xf32, #tpu.memory_space<vmem>>, vector<1x128xf32>
    %97 = vector.broadcast %96 : vector<1x128xf32> to vector<8x128xf32>
    %98 = arith.addf %95, %97 : vector<8x128xf32>
    %99 = vector.broadcast %36 : vector<8x1xf32> to vector<8x128xf32>
    %100 = arith.mulf %98, %99 : vector<8x128xf32>
    %101 = vector.extract_strided_slice %7 {offsets = [4, 0], sizes = [8, 128], strides = [1, 1]} : vector<16x128xf32> to vector<8x128xf32>
    %102 = arith.addf %101, %100 : vector<8x128xf32>
    %cst_43 = arith.constant dense<0.000000e+00> : vector<8xf32>
    %103 = vector.multi_reduction <add>, %102, %cst_43 [1] : vector<8x128xf32> to vector<8xf32>
    %104 = vector.shape_cast %103 : vector<8xf32> to vector<8x1xf32>
    %cst_44 = arith.constant 2.500000e-01 : f32
    %105 = vector.broadcast %cst_44 : f32 to vector<8x1xf32>
    %106 = arith.mulf %104, %105 : vector<8x1xf32>
    %107 = vector.broadcast %106 : vector<8x1xf32> to vector<8x128xf32>
    %108 = arith.subf %102, %107 : vector<8x128xf32>
    %109 = tpu.iota {dimensions = array<i32: 1>} : vector<1x128xi32>
    %c4_i32_45 = arith.constant 4 : i32
    %110 = vector.broadcast %c4_i32_45 : i32 to vector<1x128xi32>
    %111 = arith.cmpi slt, %109, %110 : vector<1x128xi32>
    %112 = arith.extui %111 : vector<1x128xi1> to vector<1x128xi32>
    %113 = arith.sitofp %112 : vector<1x128xi32> to vector<1x128xf32>
    %114 = vector.broadcast %113 : vector<1x128xf32> to vector<8x128xf32>
    %115 = arith.mulf %108, %114 : vector<8x128xf32>
    %116 = arith.mulf %115, %115 : vector<8x128xf32>
    %cst_46 = arith.constant dense<0.000000e+00> : vector<8xf32>
    %117 = vector.multi_reduction <add>, %116, %cst_46 [1] : vector<8x128xf32> to vector<8xf32>
    %118 = vector.shape_cast %117 : vector<8xf32> to vector<8x1xf32>
    %cst_47 = arith.constant 2.500000e-01 : f32
    %119 = vector.broadcast %cst_47 : f32 to vector<8x1xf32>
    %120 = arith.mulf %118, %119 : vector<8x1xf32>
    %cst_48 = arith.constant 9.99999974E-6 : f32
    %121 = vector.broadcast %cst_48 : f32 to vector<8x1xf32>
    %122 = arith.addf %120, %121 : vector<8x1xf32>
    %123 = math.rsqrt %122 : vector<8x1xf32>
    %124 = vector.broadcast %123 : vector<8x1xf32> to vector<8x128xf32>
    %125 = arith.mulf %115, %124 : vector<8x128xf32>
    %c0_49 = arith.constant 0 : index
    %c0_50 = arith.constant 0 : index
    %126 = vector.load %arg8[%c0_49, %c0_50] : memref<1x128xf32, #tpu.memory_space<vmem>>, vector<1x128xf32>
    %127 = vector.broadcast %126 : vector<1x128xf32> to vector<8x128xf32>
    %128 = arith.mulf %125, %127 : vector<8x128xf32>
    %c0_51 = arith.constant 0 : index
    %c0_52 = arith.constant 0 : index
    %129 = vector.load %arg9[%c0_51, %c0_52] : memref<1x128xf32, #tpu.memory_space<vmem>>, vector<1x128xf32>
    %130 = vector.broadcast %129 : vector<1x128xf32> to vector<8x128xf32>
    %131 = arith.addf %128, %130 : vector<8x128xf32>
    %132 = vector.broadcast %36 : vector<8x1xf32> to vector<8x128xf32>
    %133 = arith.mulf %131, %132 : vector<8x128xf32>
    %c0_53 = arith.constant 0 : index
    %c0_54 = arith.constant 0 : index
    %c0_55 = arith.constant 0 : index
    %134 = vector.load %arg10[%c0_53, %c0_54, %c0_55] : memref<1x8x128xf32, #tpu.memory_space<vmem>>, vector<1x8x128xf32>
    %135 = vector.shape_cast %134 : vector<1x8x128xf32> to vector<8x128xf32>
    %136 = vector.shape_cast %133 : vector<8x128xf32> to vector<1x8x128xf32>
    tpu.vector_store %arg10[%c0_53, %c0_54, %c0_55], %136 {strides = array<i32>} : memref<1x8x128xf32, #tpu.memory_space<vmem>>, vector<1x8x128xf32>,
    return
  }
  func.func @transform_0(%arg0: i32, %arg1: i32, %arg2: memref<2xi32, #tpu.memory_space<smem>>) -> (i32, i32, i32) {
    %c0_i32 = arith.constant 0 : i32
    %c0_i32_0 = arith.constant 0 : i32
    %c0_i32_1 = arith.constant 0 : i32
    return %arg0, %c0_i32, %c0_i32_0 : i32, i32, i32
  }
  func.func @transform_1(%arg0: i32, %arg1: i32, %arg2: memref<2xi32, #tpu.memory_space<smem>>) -> (i32, i32, i32) {
    %c0_i32 = arith.constant 0 : i32
    %c0_i32_0 = arith.constant 0 : i32
    %c0_i32_1 = arith.constant 0 : i32
    %c0_i32_2 = arith.constant 0 : i32
    return %c0_i32, %c0_i32_0, %c0_i32_1 : i32, i32, i32
  }
  func.func @transform_2(%arg0: i32, %arg1: i32, %arg2: memref<2xi32, #tpu.memory_space<smem>>) -> (i32, i32) {
    %c0_i32 = arith.constant 0 : i32
    %c0_i32_0 = arith.constant 0 : i32
    %c0_i32_1 = arith.constant 0 : i32
    return %c0_i32, %c0_i32_0 : i32, i32
  }
  func.func @transform_3(%arg0: i32, %arg1: i32, %arg2: memref<2xi32, #tpu.memory_space<smem>>) -> (i32, i32, i32) {
    %c0_i32 = arith.constant 0 : i32
    %c0_i32_0 = arith.constant 0 : i32
    %c0_i32_1 = arith.constant 0 : i32
    %c0_i32_2 = arith.constant 0 : i32
    return %c0_i32, %c0_i32_0, %c0_i32_1 : i32, i32, i32
  }
  func.func @transform_4(%arg0: i32, %arg1: i32, %arg2: memref<2xi32, #tpu.memory_space<smem>>) -> (i32, i32) {
    %c0_i32 = arith.constant 0 : i32
    %c0_i32_0 = arith.constant 0 : i32
    %c0_i32_1 = arith.constant 0 : i32
    return %c0_i32, %c0_i32_0 : i32, i32
  }
  func.func @transform_5(%arg0: i32, %arg1: i32, %arg2: memref<2xi32, #tpu.memory_space<smem>>) -> (i32, i32) {
    %c0_i32 = arith.constant 0 : i32
    %c0_i32_0 = arith.constant 0 : i32
    %c0_i32_1 = arith.constant 0 : i32
    return %c0_i32, %c0_i32_0 : i32, i32
  }
  func.func @transform_6(%arg0: i32, %arg1: i32, %arg2: memref<2xi32, #tpu.memory_space<smem>>) -> (i32, i32) {
    %c0_i32 = arith.constant 0 : i32
    %c0_i32_0 = arith.constant 0 : i32
    %c0_i32_1 = arith.constant 0 : i32
    return %c0_i32, %c0_i32_0 : i32, i32
  }
  func.func @transform_7(%arg0: i32, %arg1: i32, %arg2: memref<2xi32, #tpu.memory_space<smem>>) -> (i32, i32, i32) {
    %c0_i32 = arith.constant 0 : i32
    %c0_i32_0 = arith.constant 0 : i32
    return %arg0, %arg1, %c0_i32 : i32, i32, i32
  }
}

</mosaic_0001>

<llo_original>
// kernel: tpu_custom_call.1
$region0: #{tpu_custom_call.1}
  #allocation0 [shape = 'u32[]', space=smem, size = 0x4, offset = 0x4, fixed_abs, tag = 'smem constant byte address 0x4 - core index']
  #allocation1 [shape = 'u32[144,128]{1,0:T(1,128)}', space=vmem, size = 0x12000, scoped, tag = 'internal scratch']
  #allocation2 [shape = 's32[1]{0}', space=sflag, size = 0x4, scoped, tag = 'scoped memory for tpu_custom_call.1']
  #allocation3 [shape = 'u8[512]{0}', space=smem, size = 0x200, scoped, tag = 'prefetched SMEM operand 0']
  %s0 = inlined_call_operand.hbm [shape: s32[2], index: 0, kind: input, shape index: {}]
  %s1 = inlined_call_operand.hbm [shape: f32[2,24,128], index: 1, kind: input, shape index: {}]
  %s2 = inlined_call_operand.hbm [shape: bf16[5,128,128], index: 2, kind: input, shape index: {}]
  %s3 = inlined_call_operand.vmem [shape: f32[1,128], index: 3, kind: input, shape index: {}]
  %s4 = inlined_call_operand.hbm [shape: bf16[5,128,128], index: 4, kind: input, shape index: {}]
  %s5 = inlined_call_operand.vmem [shape: f32[1,128], index: 5, kind: input, shape index: {}]
  %s6 = inlined_call_operand.vmem [shape: f32[1,128], index: 6, kind: input, shape index: {}]
  %s7 = inlined_call_operand.vmem [shape: f32[1,128], index: 7, kind: input, shape index: {}]
  %s8 = inlined_call_operand.hbm [shape: f32[2,16,128], index: 8, kind: output, shape index: {}]
  %s9 = sld [smem:[#allocation0]]
  $region73: #{tpu_custom_call.1} parent=0
    _
  %s11 = ssub.s32 1, %s9
  %s12 = scalar_select 0, %s11, %s9
  %14 = dma.hbm_to_smem %s0, 16, [#allocation3], [#allocation2]
  %15 = dma.done [#allocation2], 16
  %16 = sfence
  $region1: #{tpu_custom_call.1} parent=0
    #allocation4 [shape = 'u8[24576]{0}', space=vmem, size = 0x6000, scoped, tag = 'input window, operand 1']
    #allocation5 [shape = 's32[2]{0}', space=sflag, size = 0x8, scoped, tag = 'scoped memory for tpu_custom_call.1']
    #allocation6 [shape = 's32[2]{0}', space=sflag, size = 0x8, scoped, tag = 'scoped memory for tpu_custom_call.1']
    #allocation7 [shape = 'u8[163840]{0}', space=vmem, size = 0x28000, scoped, tag = 'input window, operand 2, single buffered']
    #allocation8 [shape = 's32[1]{0}', space=sflag, size = 0x4, scoped, tag = 'scoped memory for tpu_custom_call.1']
    #allocation9 [shape = 'u8[163840]{0}', space=vmem, size = 0x28000, scoped, tag = 'input window, operand 4, single buffered']
    #allocation10 [shape = 'u8[8192]{0}', space=vmem, size = 0x2000, scoped, tag = 'output window, operand 0']
    %17 = vsyncpa [#allocation5], 0
    %s18 = scalar_lea.sflag [#allocation5], 1
    %19 = vsyncpa %s18, 0
    %20 = vsyncpa [#allocation8], 0
    %21 = vsyncpa [#allocation6], 0
    %s22 = scalar_lea.sflag [#allocation6], 1
    %23 = vsyncpa %s22, 0
    loop: start=0, step=1, limit=6
    $region2: #{tpu_custom_call.1} parent=1 // loop_pre_header
      _
    $region3: #{tpu_custom_call.1} parent=1 // loop_header
      %s25 = sphi 0, %s29
      %p26 = scmp.ge.s32.totalorder %s25, 6
      %s32 = sphi 0, %s44
      %s33 = sphi 0, %s40
      %s34 = sphi 0, %s32
      %s35 = sphi 0, %s33
      %s36 = sphi 0, %s34
      %s37 = sphi 0, %s35
      %s47 = sphi 0, %s49
      %s50 = sphi 0, %s47
      %s51 = sphi 0, %s50
      %s67 = sphi 0, %s51
      %s71 = sphi 0, %s71
      %s73 = sphi 0, %s71
      %s74 = sphi 0, %s73
      %s88 = sphi 0, %s74
      %s92 = sphi 0, %s92
      %s94 = sphi 0, %s92
      %s95 = sphi 0, %s94
      %s109 = sphi 0, %s95
      %s113 = sphi 0, %s113
      %s115 = sphi 0, %s113
      %s116 = sphi 0, %s115
      %s130 = sphi 0, %s116
      %s134 = sphi 0, %s134
      %s136 = sphi 0, %s134
      %s137 = sphi 0, %s136
      %s151 = sphi 0, %s137
      %s155 = sphi 0, %s155
      %s157 = sphi 0, %s155
      %s158 = sphi 0, %s157
      %s172 = sphi 0, %s158
      %s176 = sphi 0, %s176
      %s178 = sphi 0, %s176
      %s179 = sphi 0, %s178
      %s193 = sphi 0, %s179
      %s201 = sphi 0, %s203
      %s204 = sphi 0, %s201
      %s205 = sphi 0, %s204
      %s221 = sphi 0, %s205
    $region4: #{tpu_custom_call.1} parent=1 // loop_header_branch
      %28 = sbr.rel (%p26) target = $region8
    $region5: #{tpu_custom_call.1} parent=1 // loop_body
      %s30 = ssub.s32 %s25, 1
      %s31 = ssub.s32 %s25, 2
      %s38 = sadd.s32 1, %s33
      %p39 = scmp.ge.s32.totalorder %s38, 2
      %s40 = scalar_select %p39, 0, %s38
      %s41 = sadd.s32 1, %s32
      %s42 = scalar_select %p39, %s41, %s32
      %p43 = scmp.ge.s32.totalorder %s42, 2
      %s44 = scalar_select %p43, 0, %s42
      %s45 = ssub.s32 %s32, %s44
      %p46 = scmp.eq.s32.totalorder %s45, 0
      %s48 = sadd.s32 %s47, 1
      %s49 = scalar_select %p46, %s47, %s48
      %p52 = pneg %p46
      %p53 = scmp.eq.s32.totalorder %s25, 3
      %p54 = por %p52, %p53
      %p55 = scmp.ne.s32.totalorder %s47, %s50
      %p56 = scmp.eq.s32.totalorder %s25, 0
      %p57 = por %p55, %p56
      %p58 = scmp.ne.s32.totalorder %s47, %s50
      %p59 = scmp.eq.s32.totalorder %s30, 3
      %p60 = por %p58, %p59
      %p61 = scmp.ne.s32.totalorder %s50, %s51
      %p62 = scmp.eq.s32.totalorder %s30, 0
      %p63 = por %p61, %p62
      %p64 = scmp.ne.s32.totalorder %s50, %s51
      %p65 = scmp.eq.s32.totalorder %s31, 3
      %p66 = por %p64, %p65
      %p68 = scmp.ne.s32.totalorder %s51, %s67
      %p69 = scmp.eq.s32.totalorder %s31, 0
      %p70 = por %p68, %p69
      %s72 = sadd.s32 %s71, 1
      %p75 = scmp.eq.s32.totalorder %s25, 3
      %p76 = scmp.ne.s32.totalorder %s71, %s73
      %p77 = scmp.eq.s32.totalorder %s25, 0
      %p78 = por %p76, %p77
      %p79 = scmp.ne.s32.totalorder %s71, %s73
      %p80 = scmp.eq.s32.totalorder %s30, 3
      %p81 = por %p79, %p80
      %p82 = scmp.ne.s32.totalorder %s73, %s74
      %p83 = scmp.eq.s32.totalorder %s30, 0
      %p84 = por %p82, %p83
      %p85 = scmp.ne.s32.totalorder %s73, %s74
      %p86 = scmp.eq.s32.totalorder %s31, 3
      %p87 = por %p85, %p86
      %p89 = scmp.ne.s32.totalorder %s74, %s88
      %p90 = scmp.eq.s32.totalorder %s31, 0
      %p91 = por %p89, %p90
      %s93 = sadd.s32 %s92, 1
      %p96 = scmp.eq.s32.totalorder %s25, 3
      %p97 = scmp.ne.s32.totalorder %s92, %s94
      %p98 = scmp.eq.s32.totalorder %s25, 0
      %p99 = por %p97, %p98
      %p100 = scmp.ne.s32.totalorder %s92, %s94
      %p101 = scmp.eq.s32.totalorder %s30, 3
      %p102 = por %p100, %p101
      %p103 = scmp.ne.s32.totalorder %s94, %s95
      %p104 = scmp.eq.s32.totalorder %s30, 0
      %p105 = por %p103, %p104
      %p106 = scmp.ne.s32.totalorder %s94, %s95
      %p107 = scmp.eq.s32.totalorder %s31, 3
      %p108 = por %p106, %p107
      %p110 = scmp.ne.s32.totalorder %s95, %s109
      %p111 = scmp.eq.s32.totalorder %s31, 0
      %p112 = por %p110, %p111
      %s114 = sadd.s32 %s113, 1
      %p117 = scmp.eq.s32.totalorder %s25, 3
      %p118 = scmp.ne.s32.totalorder %s113, %s115
      %p119 = scmp.eq.s32.totalorder %s25, 0
      %p120 = por %p118, %p119
      %p121 = scmp.ne.s32.totalorder %s113, %s115
      %p122 = scmp.eq.s32.totalorder %s30, 3
      %p123 = por %p121, %p122
      %p124 = scmp.ne.s32.totalorder %s115, %s116
      %p125 = scmp.eq.s32.totalorder %s30, 0
      %p126 = por %p124, %p125
      %p127 = scmp.ne.s32.totalorder %s115, %s116
      %p128 = scmp.eq.s32.totalorder %s31, 3
      %p129 = por %p127, %p128
      %p131 = scmp.ne.s32.totalorder %s116, %s130
      %p132 = scmp.eq.s32.totalorder %s31, 0
      %p133 = por %p131, %p132
      %s135 = sadd.s32 %s134, 1
      %p138 = scmp.eq.s32.totalorder %s25, 3
      %p139 = scmp.ne.s32.totalorder %s134, %s136
      %p140 = scmp.eq.s32.totalorder %s25, 0
      %p141 = por %p139, %p140
      %p142 = scmp.ne.s32.totalorder %s134, %s136
      %p143 = scmp.eq.s32.totalorder %s30, 3
      %p144 = por %p142, %p143
      %p145 = scmp.ne.s32.totalorder %s136, %s137
      %p146 = scmp.eq.s32.totalorder %s30, 0
      %p147 = por %p145, %p146
      %p148 = scmp.ne.s32.totalorder %s136, %s137
      %p149 = scmp.eq.s32.totalorder %s31, 3
      %p150 = por %p148, %p149
      %p152 = scmp.ne.s32.totalorder %s137, %s151
      %p153 = scmp.eq.s32.totalorder %s31, 0
      %p154 = por %p152, %p153
      %s156 = sadd.s32 %s155, 1
      %p159 = scmp.eq.s32.totalorder %s25, 3
      %p160 = scmp.ne.s32.totalorder %s155, %s157
      %p161 = scmp.eq.s32.totalorder %s25, 0
      %p162 = por %p160, %p161
      %p163 = scmp.ne.s32.totalorder %s155, %s157
      %p164 = scmp.eq.s32.totalorder %s30, 3
      %p165 = por %p163, %p164
      %p166 = scmp.ne.s32.totalorder %s157, %s158
      %p167 = scmp.eq.s32.totalorder %s30, 0
      %p168 = por %p166, %p167
      %p169 = scmp.ne.s32.totalorder %s157, %s158
      %p170 = scmp.eq.s32.totalorder %s31, 3
      %p171 = por %p169, %p170
      %p173 = scmp.ne.s32.totalorder %s158, %s172
      %p174 = scmp.eq.s32.totalorder %s31, 0
      %p175 = por %p173, %p174
      %s177 = sadd.s32 %s176, 1
      %p180 = scmp.eq.s32.totalorder %s25, 3
      %p181 = scmp.ne.s32.totalorder %s176, %s178
      %p182 = scmp.eq.s32.totalorder %s25, 0
      %p183 = por %p181, %p182
      %p184 = scmp.ne.s32.totalorder %s176, %s178
      %p185 = scmp.eq.s32.totalorder %s30, 3
      %p186 = por %p184, %p185
      %p187 = scmp.ne.s32.totalorder %s178, %s179
      %p188 = scmp.eq.s32.totalorder %s30, 0
      %p189 = por %p187, %p188
      %p190 = scmp.ne.s32.totalorder %s178, %s179
      %p191 = scmp.eq.s32.totalorder %s31, 3
      %p192 = por %p190, %p191
      %p194 = scmp.ne.s32.totalorder %s179, %s193
      %p195 = scmp.eq.s32.totalorder %s31, 0
      %p196 = por %p194, %p195
      %s197 = ssub.s32 %s32, %s44
      %s198 = ssub.s32 %s33, %s40
      %s199 = sor.u32 %s197, %s198
      %p200 = scmp.eq.s32.totalorder %s199, 0
      %s202 = sadd.s32 %s201, 1
      %s203 = scalar_select %p200, %s201, %s202
      %p206 = pneg %p200
      %p207 = scmp.eq.s32.totalorder %s25, 3
      %p208 = por %p206, %p207
      %p209 = scmp.ne.s32.totalorder %s201, %s204
      %p210 = scmp.eq.s32.totalorder %s25, 0
      %p211 = por %p209, %p210
      %p212 = scmp.ne.s32.totalorder %s201, %s204
      %p213 = scmp.eq.s32.totalorder %s30, 3
      %p214 = por %p212, %p213
      %p215 = scmp.ne.s32.totalorder %s204, %s205
      %p216 = scmp.eq.s32.totalorder %s30, 0
      %p217 = por %p215, %p216
      %p218 = scmp.ne.s32.totalorder %s204, %s205
      %p219 = scmp.eq.s32.totalorder %s31, 3
      %p220 = por %p218, %p219
      %p222 = scmp.ne.s32.totalorder %s205, %s221
      %p223 = scmp.eq.s32.totalorder %s31, 0
      %p224 = por %p222, %p223
      %p225 = scmp.le.s32.totalorder 1, %s25
      %p226 = scmp.lt.s32.totalorder %s25, 5
      %p227 = pnand %p225, %p226
      %p228 = pneg %p227
      // Predicated region
      $region9: #{tpu_custom_call.1} parent=5 // pred_check
        _
      $region10: #{tpu_custom_call.1} parent=5 // pred_check_branch
        %230 = sbr.rel (%p227) target = $region12
      $region11: #{tpu_custom_call.1} parent=5 // pred_region
        %s231 = ssub.s32 %s25, 1
        // Predicated region
        $region13: #{tpu_custom_call.1} parent=11 // pred_check
          %p232 = pneg %p84
        $region14: #{tpu_custom_call.1} parent=11 // pred_check_branch
          %234 = sbr.rel (%p232) target = $region16
        $region15: #{tpu_custom_call.1} parent=11 // pred_region
          %s236 = ssub.s32 5120, 5120
          %237 = vsyncadd [#allocation8], %s236
          %s238 = sshll.u32 [#allocation7], 4
          %s239 = int_to_ptr.vmem [resolvable:$true] %s238
          %244 = dma.hbm_to_vmem [thread:$0]  %s2, 5120, %s239, [#allocation8], 64, 64, 4
        $region16: #{tpu_custom_call.1} parent=11 // pred_fallthru
          _
        // Predicated region
        $region17: #{tpu_custom_call.1} parent=11 // pred_check
          %p245 = pneg %p105
        $region18: #{tpu_custom_call.1} parent=11 // pred_check_branch
          %247 = sbr.rel (%p245) target = $region20
        $region19: #{tpu_custom_call.1} parent=11 // pred_region
          _
        $region20: #{tpu_custom_call.1} parent=11 // pred_fallthru
          _
        // Predicated region
        $region21: #{tpu_custom_call.1} parent=11 // pred_check
          %p248 = pneg %p126
        $region22: #{tpu_custom_call.1} parent=11 // pred_check_branch
          %250 = sbr.rel (%p248) target = $region24
        $region23: #{tpu_custom_call.1} parent=11 // pred_region
          %s252 = ssub.s32 5120, 5120
          %253 = vsyncadd [#allocation8], %s252
          %s254 = sshll.u32 [#allocation9], 4
          %s255 = int_to_ptr.vmem [resolvable:$true] %s254
          %260 = dma.hbm_to_vmem [thread:$0]  %s4, 5120, %s255, [#allocation8], 64, 64, 4
        $region24: #{tpu_custom_call.1} parent=11 // pred_fallthru
          _
        // Predicated region
        $region25: #{tpu_custom_call.1} parent=11 // pred_check
          %p261 = pneg %p147
        $region26: #{tpu_custom_call.1} parent=11 // pred_check_branch
          %263 = sbr.rel (%p261) target = $region28
        $region27: #{tpu_custom_call.1} parent=11 // pred_region
          _
        $region28: #{tpu_custom_call.1} parent=11 // pred_fallthru
          _
        // Predicated region
        $region29: #{tpu_custom_call.1} parent=11 // pred_check
          %p264 = pneg %p168
        $region30: #{tpu_custom_call.1} parent=11 // pred_check_branch
          %266 = sbr.rel (%p264) target = $region32
        $region31: #{tpu_custom_call.1} parent=11 // pred_region
          _
        $region32: #{tpu_custom_call.1} parent=11 // pred_fallthru
          _
        // Predicated region
        $region33: #{tpu_custom_call.1} parent=11 // pred_check
          %p267 = pneg %p189
        $region34: #{tpu_custom_call.1} parent=11 // pred_check_branch
          %269 = sbr.rel (%p267) target = $region36
        $region35: #{tpu_custom_call.1} parent=11 // pred_region
          _
        $region36: #{tpu_custom_call.1} parent=11 // pred_fallthru
          _
      $region12: #{tpu_custom_call.1} parent=5 // pred_fallthru
        _
      %p270 = scmp.lt.s32.totalorder %s25, 4
      // Predicated region
      $region37: #{tpu_custom_call.1} parent=5 // pred_check
        %p271 = pneg %p270
      $region38: #{tpu_custom_call.1} parent=5 // pred_check_branch
        %273 = sbr.rel (%p271) target = $region40
      $region39: #{tpu_custom_call.1} parent=5 // pred_region
        // Predicated region
        $region41: #{tpu_custom_call.1} parent=39 // pred_check
          %p274 = pneg %p57
        $region42: #{tpu_custom_call.1} parent=39 // pred_check_branch
          %276 = sbr.rel (%p274) target = $region44
        $region43: #{tpu_custom_call.1} parent=39 // pred_region
          %s277 = sand.u32 %s47, 1
          %s278 = scalar_lea.sflag [#allocation5], %s277
          %s279 = sand.u32 %s47, 1
          %s280 = smul.addr %s279, 24
          %s281 = scalar_lea.vmem [#allocation4], %s280
          %s283 = ssub.s32 384, 384
          %284 = vsyncadd %s278, %s283
          %s285 = smul.addr %s32, 3
          %s286 = smul.addr %s285, 128
          %s287 = scalar_lea.hbm %s1, %s286
          %s288 = sshll.u32 %s281, 4
          %s289 = int_to_ptr.vmem [resolvable:$true] %s288
          %294 = dma.hbm_to_vmem [thread:$0]  %s287, 384, %s289, %s278, 128, 128, 8
        $region44: #{tpu_custom_call.1} parent=39 // pred_fallthru
          _
      $region40: #{tpu_custom_call.1} parent=5 // pred_fallthru
        _
      %p295 = scmp.le.s32.totalorder 1, %s25
      %p296 = scmp.lt.s32.totalorder %s25, 5
      %p297 = pnand %p295, %p296
      %p298 = pneg %p297
      // Predicated region
      $region45: #{tpu_custom_call.1} parent=5 // pred_check
        _
      $region46: #{tpu_custom_call.1} parent=5 // pred_check_branch
        %300 = sbr.rel (%p297) target = $region48
      $region47: #{tpu_custom_call.1} parent=5 // pred_region
        %s301 = ssub.s32 %s25, 1
        %s302 = sand.u32 %s50, 1
        %s303 = scalar_lea.sflag [#allocation5], %s302
        %s304 = sand.u32 %s50, 1
        %s305 = smul.addr %s304, 24
        %s306 = scalar_lea.vmem [#allocation4], %s305
        // Predicated region
        $region49: #{tpu_custom_call.1} parent=47 // pred_check
          %p307 = pneg %p63
        $region50: #{tpu_custom_call.1} parent=47 // pred_check_branch
          %309 = sbr.rel (%p307) target = $region52
        $region51: #{tpu_custom_call.1} parent=47 // pred_region
          %310 = dma.done %s303, 384
        $region52: #{tpu_custom_call.1} parent=47 // pred_fallthru
          _
        // Predicated region
        $region53: #{tpu_custom_call.1} parent=47 // pred_check
          %p311 = pneg %p84
        $region54: #{tpu_custom_call.1} parent=47 // pred_check_branch
          %313 = sbr.rel (%p311) target = $region56
        $region55: #{tpu_custom_call.1} parent=47 // pred_region
          %314 = dma.done [#allocation8], 5120
        $region56: #{tpu_custom_call.1} parent=47 // pred_fallthru
          _
        // Predicated region
        $region57: #{tpu_custom_call.1} parent=47 // pred_check
          %p315 = pneg %p126
        $region58: #{tpu_custom_call.1} parent=47 // pred_check_branch
          %317 = sbr.rel (%p315) target = $region60
        $region59: #{tpu_custom_call.1} parent=47 // pred_region
          %318 = dma.done [#allocation8], 5120
        $region60: #{tpu_custom_call.1} parent=47 // pred_fallthru
          _
        %s319 = sand.u32 %s50, 1
        %s320 = scalar_lea.sflag [#allocation5], %s319
        %s321 = sand.u32 %s50, 1
        %s322 = smul.addr %s321, 24
        %s323 = scalar_lea.vmem [#allocation4], %s322
        %p324 = pneg %p63
        %p325 = pneg %p60
        %p326 = pneg %p84
        %p327 = pneg %p81
        %p328 = pneg %p105
        %p329 = pneg %p102
        %p330 = pneg %p126
        %p331 = pneg %p123
        %p332 = pneg %p147
        %p333 = pneg %p144
        %p334 = pneg %p168
        %p335 = pneg %p165
        %p336 = pneg %p189
        %p337 = pneg %p186
        %p338 = pneg %p217
        %p339 = pneg %p214
        %s340 = sand.u32 %s204, 1
        %s341 = scalar_lea.sflag [#allocation6], %s340
        %s342 = sand.u32 %s204, 1
        %s343 = smul.addr %s342, 8
        %s344 = scalar_lea.vmem [#allocation10], %s343
        %s346 = sld [smem:[#allocation3 + %s34]]
        %s347 = smul.u32 %s35, 8
        %s348 = scalar_lea.vmem %s306, %s347 [#allocation4]
        %v349 = vld [vmem:[%s348] sm:$0xff]
        %v350 = vld [vmem:[%s348 + $0x8] sm:$0xff]
        %v351 = vlaneseq
        %v352 = vshrl.u32 %v351, 7
        %v353 = vadd.s32 %v352, 8
        %s354 = ssub.s32 %s347, 4
        %v355 = vstv %s354
        %v356 = vadd.s32 %v352, %v355
        %v357 = vadd.s32 %v353, %v355
        %vm358 = vcmp.ge.s32.totalorder %v356, 0
        %vm359 = vcmp.ge.s32.totalorder %v357, 0
        %v360 = vstv %s346
        %vm361 = vcmp.lt.s32.totalorder %v356, %v360
        %vm362 = vcmp.lt.s32.totalorder %v357, %v360
        %vm363 = vmand %vm358, %vm361
        %vm364 = vmand %vm359, %vm362
        %v365 = vsel %vm363, 1, 0
        %v366 = vsel %vm364, 1, 0
        %v367 = vcvt.s32.f32 %v365
        %v368 = vcvt.s32.f32 %v366
        %s369 = ssub.s32 %s347, 2
        %v370 = vstv %s369
        %v371 = vadd.s32 %v352, %v370
        %v372 = vadd.s32 %v353, %v370
        %vm373 = vcmp.ge.s32.totalorder %v371, 0
        %vm374 = vcmp.ge.s32.totalorder %v372, 0
        %vm375 = vcmp.lt.s32.totalorder %v371, %v360
        %vm376 = vcmp.lt.s32.totalorder %v372, %v360
        %vm377 = vmand %vm373, %vm375
        %vm378 = vmand %vm374, %vm376
        %v379 = vsel %vm377, 1, 0
        %v380 = vsel %vm378, 1, 0
        %v381 = vcvt.s32.f32 %v379
        %v382 = vcvt.s32.f32 %v380
        %v383 = vstv %s347
        %v384 = vadd.s32 %v352, %v383
        %vm385 = vcmp.lt.s32.totalorder %v384, %v360
        %v386 = vsel %vm385, 1, 0
        %v387 = vcvt.s32.f32 %v386
        %v388 = vmul.f32 %v349, %v367
        %v389 = vmul.f32 %v350, %v368
        %v390 = vpack.c.bf16 %v389, %v388
        %v391 = vld [vmem:[#allocation7] sm:$0xf]
        %v392 = vld [vmem:[#allocation7 + $0x4] sm:$0xf]
        %v393 = vld [vmem:[#allocation7 + $0x8] sm:$0xf]
        %v394 = vld [vmem:[#allocation7 + $0xc] sm:$0xf]
        %v395 = vld [vmem:[#allocation7 + $0x10] sm:$0xf]
        %v396 = vld [vmem:[#allocation7 + $0x14] sm:$0xf]
        %v397 = vld [vmem:[#allocation7 + $0x18] sm:$0xf]
        %v398 = vld [vmem:[#allocation7 + $0x1c] sm:$0xf]
        %v399 = vld [vmem:[#allocation7 + $0x20] sm:$0xf]
        %v400 = vld [vmem:[#allocation7 + $0x24] sm:$0xf]
        %v401 = vld [vmem:[#allocation7 + $0x28] sm:$0xf]
        %v402 = vld [vmem:[#allocation7 + $0x2c] sm:$0xf]
        %v403 = vld [vmem:[#allocation7 + $0x30] sm:$0xf]
        %v404 = vld [vmem:[#allocation7 + $0x34] sm:$0xf]
        %v405 = vld [vmem:[#allocation7 + $0x38] sm:$0xf]
        %v406 = vld [vmem:[#allocation7 + $0x3c] sm:$0xf]
        %s407 = scalar_lea.vmem [#allocation7], 64
        %v408 = vld [vmem:[%s407] sm:$0xf]
        %v409 = vld [vmem:[%s407 + $0x4] sm:$0xf]
        %v410 = vld [vmem:[%s407 + $0x8] sm:$0xf]
        %v411 = vld [vmem:[%s407 + $0xc] sm:$0xf]
        %v412 = vld [vmem:[%s407 + $0x10] sm:$0xf]
        %v413 = vld [vmem:[%s407 + $0x14] sm:$0xf]
        %v414 = vld [vmem:[%s407 + $0x18] sm:$0xf]
        %v415 = vld [vmem:[%s407 + $0x1c] sm:$0xf]
        %v416 = vld [vmem:[%s407 + $0x20] sm:$0xf]
        %v417 = vld [vmem:[%s407 + $0x24] sm:$0xf]
        %v418 = vld [vmem:[%s407 + $0x28] sm:$0xf]
        %v419 = vld [vmem:[%s407 + $0x2c] sm:$0xf]
        %v420 = vld [vmem:[%s407 + $0x30] sm:$0xf]
        %v421 = vld [vmem:[%s407 + $0x34] sm:$0xf]
        %v422 = vld [vmem:[%s407 + $0x38] sm:$0xf]
        %v423 = vld [vmem:[%s407 + $0x3c] sm:$0xf]
        %v425 = vshrl.u32 %v390, 16
        %v427 = vshll.u32 %v390, 16
        %v429 = vrot.slane %v427, 1
        %v430 = vor.u32 %v425, %v429
        %v448 = vunpack.c.l.b16 %v408
        %v449 = vunpack.c.l.b16 %v409
        %v450 = vunpack.c.l.b16 %v410
        %v451 = vunpack.c.l.b16 %v411
        %v452 = vunpack.c.l.b16 %v412
        %v453 = vunpack.c.l.b16 %v413
        %v454 = vunpack.c.l.b16 %v414
        %v455 = vunpack.c.l.b16 %v415
        %v456 = vunpack.c.l.b16 %v416
        %v457 = vunpack.c.l.b16 %v417
        %v458 = vunpack.c.l.b16 %v418
        %v459 = vunpack.c.l.b16 %v419
        %v460 = vunpack.c.l.b16 %v420
        %v461 = vunpack.c.l.b16 %v421
        %v462 = vunpack.c.l.b16 %v422
        %v463 = vunpack.c.l.b16 %v423
        %v464 = vpack.c.b16 %v449, %v448
        %v465 = vpack.c.b16 %v451, %v450
        %v466 = vpack.c.b16 %v453, %v452
        %v467 = vpack.c.b16 %v455, %v454
        %v468 = vpack.c.b16 %v457, %v456
        %v469 = vpack.c.b16 %v459, %v458
        %v470 = vpack.c.b16 %v461, %v460
        %v471 = vpack.c.b16 %v463, %v462
        %480 = vmatprep.subr.bf16.mxu0 0
        %481 = vmatpush1.bf16.msra.mxu0 %v464
        %482 = vmatprep.subr.bf16.mxu0 0
        %483 = vmatpush1.bf16.msra.mxu0 %v465
        %484 = vmatprep.subr.bf16.mxu0 0
        %485 = vmatpush1.bf16.msra.mxu0 %v466
        %486 = vmatprep.subr.bf16.mxu0 0
        %487 = vmatpush1.bf16.msra.mxu0 %v467
        %488 = vmatprep.subr.bf16.mxu0 0
        %489 = vmatpush1.bf16.msra.mxu0 %v468
        %490 = vmatprep.subr.bf16.mxu0 0
        %491 = vmatpush1.bf16.msra.mxu0 %v469
        %492 = vmatprep.subr.bf16.mxu0 0
        %493 = vmatpush1.bf16.msra.mxu0 %v470
        %494 = vmatprep.subr.bf16.mxu0 0
        %495 = vmatpush1.bf16.msra.mxu0 %v471
        %496 = vmatprep.subr.bf16.mxu0 0
        %497 = vmatpush1.bf16.msra.mxu0 0
        %498 = vmatprep.subr.bf16.mxu0 0
        %499 = vmatpush1.bf16.msra.mxu0 0
        %500 = vmatprep.subr.bf16.mxu0 0
        %501 = vmatpush1.bf16.msra.mxu0 0
        %502 = vmatprep.subr.bf16.mxu0 0
        %503 = vmatpush1.bf16.msra.mxu0 0
        %504 = vmatprep.subr.bf16.mxu0 0
        %505 = vmatpush1.bf16.msra.mxu0 0
        %506 = vmatprep.subr.bf16.mxu0 0
        %507 = vmatpush1.bf16.msra.mxu0 0
        %508 = vmatprep.subr.bf16.mxu0 0
        %509 = vmatpush1.bf16.msra.mxu0 0
        %510 = vmatprep.subr.bf16.mxu0 0
        %511 = vmatpush1.bf16.msra.mxu0 0
        %512 = vmatprep.mubr.bf16.mxu0 0
        %513 = vmatmul.mubr.bf16.gmra.mrb[0].mxu0 %v430
        %v514 = vpop.f32.mrb[0].mxu0
        %v515 = vadd.f32 0.0, %v514
        %v516 = vpop.f32.mrb[0].mxu0
        %v517 = vpop.f32.mrb[0].mxu0
        %v518 = vadd.f32 0.0, %v517
        %v519 = vpop.f32.mrb[0].mxu0
        %520 = vdwg.mxu0
        %v537 = vunpack.c.l.b16 %v391
        %v538 = vunpack.c.l.b16 %v392
        %v539 = vunpack.c.l.b16 %v393
        %v540 = vunpack.c.l.b16 %v394
        %v541 = vunpack.c.l.b16 %v395
        %v542 = vunpack.c.l.b16 %v396
        %v543 = vunpack.c.l.b16 %v397
        %v544 = vunpack.c.l.b16 %v398
        %v545 = vunpack.c.l.b16 %v399
        %v546 = vunpack.c.l.b16 %v400
        %v547 = vunpack.c.l.b16 %v401
        %v548 = vunpack.c.l.b16 %v402
        %v549 = vunpack.c.l.b16 %v403
        %v550 = vunpack.c.l.b16 %v404
        %v551 = vunpack.c.l.b16 %v405
        %v552 = vunpack.c.l.b16 %v406
        %v553 = vpack.c.b16 %v538, %v537
        %v554 = vpack.c.b16 %v540, %v539
        %v555 = vpack.c.b16 %v542, %v541
        %v556 = vpack.c.b16 %v544, %v543
        %v557 = vpack.c.b16 %v546, %v545
        %v558 = vpack.c.b16 %v548, %v547
        %v559 = vpack.c.b16 %v550, %v549
        %v560 = vpack.c.b16 %v552, %v551
        %569 = vmatprep.subr.bf16.mxu0 0
        %570 = vmatpush1.bf16.msra.mxu0 %v553
        %571 = vmatprep.subr.bf16.mxu0 0
        %572 = vmatpush1.bf16.msra.mxu0 %v554
        %573 = vmatprep.subr.bf16.mxu0 0
        %574 = vmatpush1.bf16.msra.mxu0 %v555
        %575 = vmatprep.subr.bf16.mxu0 0
        %576 = vmatpush1.bf16.msra.mxu0 %v556
        %577 = vmatprep.subr.bf16.mxu0 0
        %578 = vmatpush1.bf16.msra.mxu0 %v557
        %579 = vmatprep.subr.bf16.mxu0 0
        %580 = vmatpush1.bf16.msra.mxu0 %v558
        %581 = vmatprep.subr.bf16.mxu0 0
        %582 = vmatpush1.bf16.msra.mxu0 %v559
        %583 = vmatprep.subr.bf16.mxu0 0
        %584 = vmatpush1.bf16.msra.mxu0 %v560
        %585 = vmatprep.subr.bf16.mxu0 0
        %586 = vmatpush1.bf16.msra.mxu0 0
        %587 = vmatprep.subr.bf16.mxu0 0
        %588 = vmatpush1.bf16.msra.mxu0 0
        %589 = vmatprep.subr.bf16.mxu0 0
        %590 = vmatpush1.bf16.msra.mxu0 0
        %591 = vmatprep.subr.bf16.mxu0 0
        %592 = vmatpush1.bf16.msra.mxu0 0
        %593 = vmatprep.subr.bf16.mxu0 0
        %594 = vmatpush1.bf16.msra.mxu0 0
        %595 = vmatprep.subr.bf16.mxu0 0
        %596 = vmatpush1.bf16.msra.mxu0 0
        %597 = vmatprep.subr.bf16.mxu0 0
        %598 = vmatpush1.bf16.msra.mxu0 0
        %599 = vmatprep.subr.bf16.mxu0 0
        %600 = vmatpush1.bf16.msra.mxu0 0
        %601 = vmatprep.mubr.bf16.mxu0 0
        %602 = vmatmul.mubr.bf16.gmra.mrb[0].mxu0 %v390
        %v603 = vpop.f32.mrb[0].mxu0
        %v604 = vadd.f32 %v515, %v603
        %v605 = vpop.f32.mrb[0].mxu0
        %v606 = vpop.f32.mrb[0].mxu0
        %v607 = vadd.f32 %v518, %v606
        %v608 = vpop.f32.mrb[0].mxu0
        %609 = vdwg.mxu0
        %s610 = scalar_lea.vmem [#allocation7], 128
        %v611 = vld [vmem:[%s610] sm:$0xf]
        %v612 = vld [vmem:[%s610 + $0x4] sm:$0xf]
        %v613 = vld [vmem:[%s610 + $0x8] sm:$0xf]
        %v614 = vld [vmem:[%s610 + $0xc] sm:$0xf]
        %v615 = vld [vmem:[%s610 + $0x10] sm:$0xf]
        %v616 = vld [vmem:[%s610 + $0x14] sm:$0xf]
        %v617 = vld [vmem:[%s610 + $0x18] sm:$0xf]
        %v618 = vld [vmem:[%s610 + $0x1c] sm:$0xf]
        %v619 = vld [vmem:[%s610 + $0x20] sm:$0xf]
        %v620 = vld [vmem:[%s610 + $0x24] sm:$0xf]
        %v621 = vld [vmem:[%s610 + $0x28] sm:$0xf]
        %v622 = vld [vmem:[%s610 + $0x2c] sm:$0xf]
        %v623 = vld [vmem:[%s610 + $0x30] sm:$0xf]
        %v624 = vld [vmem:[%s610 + $0x34] sm:$0xf]
        %v625 = vld [vmem:[%s610 + $0x38] sm:$0xf]
        %v626 = vld [vmem:[%s610 + $0x3c] sm:$0xf]
        %v628 = vrot.slane %v390, 1
        %v646 = vunpack.c.l.b16 %v611
        %v647 = vunpack.c.l.b16 %v612
        %v648 = vunpack.c.l.b16 %v613
        %v649 = vunpack.c.l.b16 %v614
        %v650 = vunpack.c.l.b16 %v615
        %v651 = vunpack.c.l.b16 %v616
        %v652 = vunpack.c.l.b16 %v617
        %v653 = vunpack.c.l.b16 %v618
        %v654 = vunpack.c.l.b16 %v619
        %v655 = vunpack.c.l.b16 %v620
        %v656 = vunpack.c.l.b16 %v621
        %v657 = vunpack.c.l.b16 %v622
        %v658 = vunpack.c.l.b16 %v623
        %v659 = vunpack.c.l.b16 %v624
        %v660 = vunpack.c.l.b16 %v625
        %v661 = vunpack.c.l.b16 %v626
        %v662 = vpack.c.b16 %v647, %v646
        %v663 = vpack.c.b16 %v649, %v648
        %v664 = vpack.c.b16 %v651, %v650
        %v665 = vpack.c.b16 %v653, %v652
        %v666 = vpack.c.b16 %v655, %v654
        %v667 = vpack.c.b16 %v657, %v656
        %v668 = vpack.c.b16 %v659, %v658
        %v669 = vpack.c.b16 %v661, %v660
        %678 = vmatprep.subr.bf16.mxu0 0
        %679 = vmatpush1.bf16.msra.mxu0 %v662
        %680 = vmatprep.subr.bf16.mxu0 0
        %681 = vmatpush1.bf16.msra.mxu0 %v663
        %682 = vmatprep.subr.bf16.mxu0 0
        %683 = vmatpush1.bf16.msra.mxu0 %v664
        %684 = vmatprep.subr.bf16.mxu0 0
        %685 = vmatpush1.bf16.msra.mxu0 %v665
        %686 = vmatprep.subr.bf16.mxu0 0
        %687 = vmatpush1.bf16.msra.mxu0 %v666
        %688 = vmatprep.subr.bf16.mxu0 0
        %689 = vmatpush1.bf16.msra.mxu0 %v667
        %690 = vmatprep.subr.bf16.mxu0 0
        %691 = vmatpush1.bf16.msra.mxu0 %v668
        %692 = vmatprep.subr.bf16.mxu0 0
        %693 = vmatpush1.bf16.msra.mxu0 %v669
        %694 = vmatprep.subr.bf16.mxu0 0
        %695 = vmatpush1.bf16.msra.mxu0 0
        %696 = vmatprep.subr.bf16.mxu0 0
        %697 = vmatpush1.bf16.msra.mxu0 0
        %698 = vmatprep.subr.bf16.mxu0 0
        %699 = vmatpush1.bf16.msra.mxu0 0
        %700 = vmatprep.subr.bf16.mxu0 0
        %701 = vmatpush1.bf16.msra.mxu0 0
        %702 = vmatprep.subr.bf16.mxu0 0
        %703 = vmatpush1.bf16.msra.mxu0 0
        %704 = vmatprep.subr.bf16.mxu0 0
        %705 = vmatpush1.bf16.msra.mxu0 0
        %706 = vmatprep.subr.bf16.mxu0 0
        %707 = vmatpush1.bf16.msra.mxu0 0
        %708 = vmatprep.subr.bf16.mxu0 0
        %709 = vmatpush1.bf16.msra.mxu0 0
        %710 = vmatprep.mubr.bf16.mxu0 0
        %711 = vmatmul.mubr.bf16.gmra.mrb[0].mxu0 %v628
        %v712 = vpop.f32.mrb[0].mxu0
        %v713 = vadd.f32 0.0, %v712
        %v714 = vpop.f32.mrb[0].mxu0
        %v715 = vpop.f32.mrb[0].mxu0
        %v716 = vadd.f32 0.0, %v715
        %v717 = vpop.f32.mrb[0].mxu0
        %718 = vdwg.mxu0
        %v719 = vadd.f32 %v604, %v713
        %v720 = vadd.f32 %v607, %v716
        %s721 = scalar_lea.vmem [#allocation7], 192
        %v722 = vld [vmem:[%s721] sm:$0xf]
        %v723 = vld [vmem:[%s721 + $0x4] sm:$0xf]
        %v724 = vld [vmem:[%s721 + $0x8] sm:$0xf]
        %v725 = vld [vmem:[%s721 + $0xc] sm:$0xf]
        %v726 = vld [vmem:[%s721 + $0x10] sm:$0xf]
        %v727 = vld [vmem:[%s721 + $0x14] sm:$0xf]
        %v728 = vld [vmem:[%s721 + $0x18] sm:$0xf]
        %v729 = vld [vmem:[%s721 + $0x1c] sm:$0xf]
        %v730 = vld [vmem:[%s721 + $0x20] sm:$0xf]
        %v731 = vld [vmem:[%s721 + $0x24] sm:$0xf]
        %v732 = vld [vmem:[%s721 + $0x28] sm:$0xf]
        %v733 = vld [vmem:[%s721 + $0x2c] sm:$0xf]
        %v734 = vld [vmem:[%s721 + $0x30] sm:$0xf]
        %v735 = vld [vmem:[%s721 + $0x34] sm:$0xf]
        %v736 = vld [vmem:[%s721 + $0x38] sm:$0xf]
        %v737 = vld [vmem:[%s721 + $0x3c] sm:$0xf]
        %v738 = vrot.slane %v425, 1
        %v739 = vrot.slane %v427, 2
        %v740 = vor.u32 %v738, %v739
        %v758 = vunpack.c.l.b16 %v722
        %v759 = vunpack.c.l.b16 %v723
        %v760 = vunpack.c.l.b16 %v724
        %v761 = vunpack.c.l.b16 %v725
        %v762 = vunpack.c.l.b16 %v726
        %v763 = vunpack.c.l.b16 %v727
        %v764 = vunpack.c.l.b16 %v728
        %v765 = vunpack.c.l.b16 %v729
        %v766 = vunpack.c.l.b16 %v730
        %v767 = vunpack.c.l.b16 %v731
        %v768 = vunpack.c.l.b16 %v732
        %v769 = vunpack.c.l.b16 %v733
        %v770 = vunpack.c.l.b16 %v734
        %v771 = vunpack.c.l.b16 %v735
        %v772 = vunpack.c.l.b16 %v736
        %v773 = vunpack.c.l.b16 %v737
        %v774 = vpack.c.b16 %v759, %v758
        %v775 = vpack.c.b16 %v761, %v760
        %v776 = vpack.c.b16 %v763, %v762
        %v777 = vpack.c.b16 %v765, %v764
        %v778 = vpack.c.b16 %v767, %v766
        %v779 = vpack.c.b16 %v769, %v768
        %v780 = vpack.c.b16 %v771, %v770
        %v781 = vpack.c.b16 %v773, %v772
        %790 = vmatprep.subr.bf16.mxu0 0
        %791 = vmatpush1.bf16.msra.mxu0 %v774
        %792 = vmatprep.subr.bf16.mxu0 0
        %793 = vmatpush1.bf16.msra.mxu0 %v775
        %794 = vmatprep.subr.bf16.mxu0 0
        %795 = vmatpush1.bf16.msra.mxu0 %v776
        %796 = vmatprep.subr.bf16.mxu0 0
        %797 = vmatpush1.bf16.msra.mxu0 %v777
        %798 = vmatprep.subr.bf16.mxu0 0
        %799 = vmatpush1.bf16.msra.mxu0 %v778
        %800 = vmatprep.subr.bf16.mxu0 0
        %801 = vmatpush1.bf16.msra.mxu0 %v779
        %802 = vmatprep.subr.bf16.mxu0 0
        %803 = vmatpush1.bf16.msra.mxu0 %v780
        %804 = vmatprep.subr.bf16.mxu0 0
        %805 = vmatpush1.bf16.msra.mxu0 %v781
        %806 = vmatprep.subr.bf16.mxu0 0
        %807 = vmatpush1.bf16.msra.mxu0 0
        %808 = vmatprep.subr.bf16.mxu0 0
        %809 = vmatpush1.bf16.msra.mxu0 0
        %810 = vmatprep.subr.bf16.mxu0 0
        %811 = vmatpush1.bf16.msra.mxu0 0
        %812 = vmatprep.subr.bf16.mxu0 0
        %813 = vmatpush1.bf16.msra.mxu0 0
        %814 = vmatprep.subr.bf16.mxu0 0
        %815 = vmatpush1.bf16.msra.mxu0 0
        %816 = vmatprep.subr.bf16.mxu0 0
        %817 = vmatpush1.bf16.msra.mxu0 0
        %818 = vmatprep.subr.bf16.mxu0 0
        %819 = vmatpush1.bf16.msra.mxu0 0
        %820 = vmatprep.subr.bf16.mxu0 0
        %821 = vmatpush1.bf16.msra.mxu0 0
        %822 = vmatprep.mubr.bf16.mxu0 0
        %823 = vmatmul.mubr.bf16.gmra.mrb[0].mxu0 %v740
        %v824 = vpop.f32.mrb[0].mxu0
        %v825 = vadd.f32 0.0, %v824
        %v826 = vpop.f32.mrb[0].mxu0
        %v827 = vpop.f32.mrb[0].mxu0
        %v828 = vadd.f32 0.0, %v827
        %v829 = vpop.f32.mrb[0].mxu0
        %830 = vdwg.mxu0
        %v831 = vadd.f32 %v719, %v825
        %v832 = vadd.f32 %v720, %v828
        %s833 = scalar_lea.vmem [#allocation7], 256
        %v834 = vld [vmem:[%s833] sm:$0xf]
        %v835 = vld [vmem:[%s833 + $0x4] sm:$0xf]
        %v836 = vld [vmem:[%s833 + $0x8] sm:$0xf]
        %v837 = vld [vmem:[%s833 + $0xc] sm:$0xf]
        %v838 = vld [vmem:[%s833 + $0x10] sm:$0xf]
        %v839 = vld [vmem:[%s833 + $0x14] sm:$0xf]
        %v840 = vld [vmem:[%s833 + $0x18] sm:$0xf]
        %v841 = vld [vmem:[%s833 + $0x1c] sm:$0xf]
        %v842 = vld [vmem:[%s833 + $0x20] sm:$0xf]
        %v843 = vld [vmem:[%s833 + $0x24] sm:$0xf]
        %v844 = vld [vmem:[%s833 + $0x28] sm:$0xf]
        %v845 = vld [vmem:[%s833 + $0x2c] sm:$0xf]
        %v846 = vld [vmem:[%s833 + $0x30] sm:$0xf]
        %v847 = vld [vmem:[%s833 + $0x34] sm:$0xf]
        %v848 = vld [vmem:[%s833 + $0x38] sm:$0xf]
        %v849 = vld [vmem:[%s833 + $0x3c] sm:$0xf]
        %v850 = vrot.slane %v390, 2
        %v868 = vunpack.c.l.b16 %v834
        %v869 = vunpack.c.l.b16 %v835
        %v870 = vunpack.c.l.b16 %v836
        %v871 = vunpack.c.l.b16 %v837
        %v872 = vunpack.c.l.b16 %v838
        %v873 = vunpack.c.l.b16 %v839
        %v874 = vunpack.c.l.b16 %v840
        %v875 = vunpack.c.l.b16 %v841
        %v876 = vunpack.c.l.b16 %v842
        %v877 = vunpack.c.l.b16 %v843
        %v878 = vunpack.c.l.b16 %v844
        %v879 = vunpack.c.l.b16 %v845
        %v880 = vunpack.c.l.b16 %v846
        %v881 = vunpack.c.l.b16 %v847
        %v882 = vunpack.c.l.b16 %v848
        %v883 = vunpack.c.l.b16 %v849
        %v884 = vpack.c.b16 %v869, %v868
        %v885 = vpack.c.b16 %v871, %v870
        %v886 = vpack.c.b16 %v873, %v872
        %v887 = vpack.c.b16 %v875, %v874
        %v888 = vpack.c.b16 %v877, %v876
        %v889 = vpack.c.b16 %v879, %v878
        %v890 = vpack.c.b16 %v881, %v880
        %v891 = vpack.c.b16 %v883, %v882
        %900 = vmatprep.subr.bf16.mxu0 0
        %901 = vmatpush1.bf16.msra.mxu0 %v884
        %902 = vmatprep.subr.bf16.mxu0 0
        %903 = vmatpush1.bf16.msra.mxu0 %v885
        %904 = vmatprep.subr.bf16.mxu0 0
        %905 = vmatpush1.bf16.msra.mxu0 %v886
        %906 = vmatprep.subr.bf16.mxu0 0
        %907 = vmatpush1.bf16.msra.mxu0 %v887
        %908 = vmatprep.subr.bf16.mxu0 0
        %909 = vmatpush1.bf16.msra.mxu0 %v888
        %910 = vmatprep.subr.bf16.mxu0 0
        %911 = vmatpush1.bf16.msra.mxu0 %v889
        %912 = vmatprep.subr.bf16.mxu0 0
        %913 = vmatpush1.bf16.msra.mxu0 %v890
        %914 = vmatprep.subr.bf16.mxu0 0
        %915 = vmatpush1.bf16.msra.mxu0 %v891
        %916 = vmatprep.subr.bf16.mxu0 0
        %917 = vmatpush1.bf16.msra.mxu0 0
        %918 = vmatprep.subr.bf16.mxu0 0
        %919 = vmatpush1.bf16.msra.mxu0 0
        %920 = vmatprep.subr.bf16.mxu0 0
        %921 = vmatpush1.bf16.msra.mxu0 0
        %922 = vmatprep.subr.bf16.mxu0 0
        %923 = vmatpush1.bf16.msra.mxu0 0
        %924 = vmatprep.subr.bf16.mxu0 0
        %925 = vmatpush1.bf16.msra.mxu0 0
        %926 = vmatprep.subr.bf16.mxu0 0
        %927 = vmatpush1.bf16.msra.mxu0 0
        %928 = vmatprep.subr.bf16.mxu0 0
        %929 = vmatpush1.bf16.msra.mxu0 0
        %930 = vmatprep.subr.bf16.mxu0 0
        %931 = vmatpush1.bf16.msra.mxu0 0
        %932 = vmatprep.mubr.bf16.mxu0 0
        %933 = vmatmul.mubr.bf16.gmra.mrb[0].mxu0 %v850
        %v934 = vpop.f32.mrb[0].mxu0
        %v935 = vadd.f32 0.0, %v934
        %v936 = vpop.f32.mrb[0].mxu0
        %v937 = vpop.f32.mrb[0].mxu0
        %v938 = vadd.f32 0.0, %v937
        %v939 = vpop.f32.mrb[0].mxu0
        %940 = vdwg.mxu0
        %v941 = vadd.f32 %v831, %v935
        %v942 = vadd.f32 %v832, %v938
        %v943 = vld [vmem:[%s3] sm:$0x1]
        %v945 = vlaneseq
        %v946 = vshrl.u32 %v945, 7
        %v947 = vsub.s32 0, %v946
        %v948 = vrot.slane %v943, %v947
        %v950 = vadd.f32 %v941, %v948
        %v951 = vadd.f32 %v942, %v948
        %v952 = vmax.f32 %v950, 0.0
        %v953 = vmax.f32 %v951, 0.0
        %v954 = vmul.f32 %v952, %v381
        %v955 = vmul.f32 %v953, %v382
        %v956 = vpack.c.bf16 %v955, %v954
        %v957 = vld [vmem:[#allocation9] sm:$0xf]
        %v958 = vld [vmem:[#allocation9 + $0x4] sm:$0xf]
        %v959 = vld [vmem:[#allocation9 + $0x8] sm:$0xf]
        %v960 = vld [vmem:[#allocation9 + $0xc] sm:$0xf]
        %v961 = vld [vmem:[#allocation9 + $0x10] sm:$0xf]
        %v962 = vld [vmem:[#allocation9 + $0x14] sm:$0xf]
        %v963 = vld [vmem:[#allocation9 + $0x18] sm:$0xf]
        %v964 = vld [vmem:[#allocation9 + $0x1c] sm:$0xf]
        %v965 = vld [vmem:[#allocation9 + $0x20] sm:$0xf]
        %v966 = vld [vmem:[#allocation9 + $0x24] sm:$0xf]
        %v967 = vld [vmem:[#allocation9 + $0x28] sm:$0xf]
        %v968 = vld [vmem:[#allocation9 + $0x2c] sm:$0xf]
        %v969 = vld [vmem:[#allocation9 + $0x30] sm:$0xf]
        %v970 = vld [vmem:[#allocation9 + $0x34] sm:$0xf]
        %v971 = vld [vmem:[#allocation9 + $0x38] sm:$0xf]
        %v972 = vld [vmem:[#allocation9 + $0x3c] sm:$0xf]
        %s973 = scalar_lea.vmem [#allocation9], 64
        %v974 = vld [vmem:[%s973] sm:$0xf]
        %v975 = vld [vmem:[%s973 + $0x4] sm:$0xf]
        %v976 = vld [vmem:[%s973 + $0x8] sm:$0xf]
        %v977 = vld [vmem:[%s973 + $0xc] sm:$0xf]
        %v978 = vld [vmem:[%s973 + $0x10] sm:$0xf]
        %v979 = vld [vmem:[%s973 + $0x14] sm:$0xf]
        %v980 = vld [vmem:[%s973 + $0x18] sm:$0xf]
        %v981 = vld [vmem:[%s973 + $0x1c] sm:$0xf]
        %v982 = vld [vmem:[%s973 + $0x20] sm:$0xf]
        %v983 = vld [vmem:[%s973 + $0x24] sm:$0xf]
        %v984 = vld [vmem:[%s973 + $0x28] sm:$0xf]
        %v985 = vld [vmem:[%s973 + $0x2c] sm:$0xf]
        %v986 = vld [vmem:[%s973 + $0x30] sm:$0xf]
        %v987 = vld [vmem:[%s973 + $0x34] sm:$0xf]
        %v988 = vld [vmem:[%s973 + $0x38] sm:$0xf]
        %v989 = vld [vmem:[%s973 + $0x3c] sm:$0xf]
        %v991 = vshrl.u32 %v956, 16
        %v993 = vshll.u32 %v956, 16
        %v995 = vrot.slane %v993, 1
        %v996 = vor.u32 %v991, %v995
        %v1014 = vunpack.c.l.b16 %v974
        %v1015 = vunpack.c.l.b16 %v975
        %v1016 = vunpack.c.l.b16 %v976
        %v1017 = vunpack.c.l.b16 %v977
        %v1018 = vunpack.c.l.b16 %v978
        %v1019 = vunpack.c.l.b16 %v979
        %v1020 = vunpack.c.l.b16 %v980
        %v1021 = vunpack.c.l.b16 %v981
        %v1022 = vunpack.c.l.b16 %v982
        %v1023 = vunpack.c.l.b16 %v983
        %v1024 = vunpack.c.l.b16 %v984
        %v1025 = vunpack.c.l.b16 %v985
        %v1026 = vunpack.c.l.b16 %v986
        %v1027 = vunpack.c.l.b16 %v987
        %v1028 = vunpack.c.l.b16 %v988
        %v1029 = vunpack.c.l.b16 %v989
        %v1030 = vpack.c.b16 %v1015, %v1014
        %v1031 = vpack.c.b16 %v1017, %v1016
        %v1032 = vpack.c.b16 %v1019, %v1018
        %v1033 = vpack.c.b16 %v1021, %v1020
        %v1034 = vpack.c.b16 %v1023, %v1022
        %v1035 = vpack.c.b16 %v1025, %v1024
        %v1036 = vpack.c.b16 %v1027, %v1026
        %v1037 = vpack.c.b16 %v1029, %v1028
        %1046 = vmatprep.subr.bf16.mxu0 0
        %1047 = vmatpush1.bf16.msra.mxu0 %v1030
        %1048 = vmatprep.subr.bf16.mxu0 0
        %1049 = vmatpush1.bf16.msra.mxu0 %v1031
        %1050 = vmatprep.subr.bf16.mxu0 0
        %1051 = vmatpush1.bf16.msra.mxu0 %v1032
        %1052 = vmatprep.subr.bf16.mxu0 0
        %1053 = vmatpush1.bf16.msra.mxu0 %v1033
        %1054 = vmatprep.subr.bf16.mxu0 0
        %1055 = vmatpush1.bf16.msra.mxu0 %v1034
        %1056 = vmatprep.subr.bf16.mxu0 0
        %1057 = vmatpush1.bf16.msra.mxu0 %v1035
        %1058 = vmatprep.subr.bf16.mxu0 0
        %1059 = vmatpush1.bf16.msra.mxu0 %v1036
        %1060 = vmatprep.subr.bf16.mxu0 0
        %1061 = vmatpush1.bf16.msra.mxu0 %v1037
        %1062 = vmatprep.subr.bf16.mxu0 0
        %1063 = vmatpush1.bf16.msra.mxu0 0
        %1064 = vmatprep.subr.bf16.mxu0 0
        %1065 = vmatpush1.bf16.msra.mxu0 0
        %1066 = vmatprep.subr.bf16.mxu0 0
        %1067 = vmatpush1.bf16.msra.mxu0 0
        %1068 = vmatprep.subr.bf16.mxu0 0
        %1069 = vmatpush1.bf16.msra.mxu0 0
        %1070 = vmatprep.subr.bf16.mxu0 0
        %1071 = vmatpush1.bf16.msra.mxu0 0
        %1072 = vmatprep.subr.bf16.mxu0 0
        %1073 = vmatpush1.bf16.msra.mxu0 0
        %1074 = vmatprep.subr.bf16.mxu0 0
        %1075 = vmatpush1.bf16.msra.mxu0 0
        %1076 = vmatprep.subr.bf16.mxu0 0
        %1077 = vmatpush1.bf16.msra.mxu0 0
        %1078 = vmatprep.mubr.bf16.mxu0 0
        %1079 = vmatmul.mubr.bf16.gmra.mrb[0].mxu0 %v996
        %v1080 = vpop.f32.mrb[0].mxu0
        %v1081 = vadd.f32 0.0, %v1080
        %v1082 = vpop.f32.mrb[0].mxu0
        %v1083 = vpop.f32.mrb[0].mxu0
        %v1084 = vpop.f32.mrb[0].mxu0
        %1085 = vdwg.mxu0
        %v1102 = vunpack.c.l.b16 %v957
        %v1103 = vunpack.c.l.b16 %v958
        %v1104 = vunpack.c.l.b16 %v959
        %v1105 = vunpack.c.l.b16 %v960
        %v1106 = vunpack.c.l.b16 %v961
        %v1107 = vunpack.c.l.b16 %v962
        %v1108 = vunpack.c.l.b16 %v963
        %v1109 = vunpack.c.l.b16 %v964
        %v1110 = vunpack.c.l.b16 %v965
        %v1111 = vunpack.c.l.b16 %v966
        %v1112 = vunpack.c.l.b16 %v967
        %v1113 = vunpack.c.l.b16 %v968
        %v1114 = vunpack.c.l.b16 %v969
        %v1115 = vunpack.c.l.b16 %v970
        %v1116 = vunpack.c.l.b16 %v971
        %v1117 = vunpack.c.l.b16 %v972
        %v1118 = vpack.c.b16 %v1103, %v1102
        %v1119 = vpack.c.b16 %v1105, %v1104
        %v1120 = vpack.c.b16 %v1107, %v1106
        %v1121 = vpack.c.b16 %v1109, %v1108
        %v1122 = vpack.c.b16 %v1111, %v1110
        %v1123 = vpack.c.b16 %v1113, %v1112
        %v1124 = vpack.c.b16 %v1115, %v1114
        %v1125 = vpack.c.b16 %v1117, %v1116
        %1134 = vmatprep.subr.bf16.mxu0 0
        %1135 = vmatpush1.bf16.msra.mxu0 %v1118
        %1136 = vmatprep.subr.bf16.mxu0 0
        %1137 = vmatpush1.bf16.msra.mxu0 %v1119
        %1138 = vmatprep.subr.bf16.mxu0 0
        %1139 = vmatpush1.bf16.msra.mxu0 %v1120
        %1140 = vmatprep.subr.bf16.mxu0 0
        %1141 = vmatpush1.bf16.msra.mxu0 %v1121
        %1142 = vmatprep.subr.bf16.mxu0 0
        %1143 = vmatpush1.bf16.msra.mxu0 %v1122
        %1144 = vmatprep.subr.bf16.mxu0 0
        %1145 = vmatpush1.bf16.msra.mxu0 %v1123
        %1146 = vmatprep.subr.bf16.mxu0 0
        %1147 = vmatpush1.bf16.msra.mxu0 %v1124
        %1148 = vmatprep.subr.bf16.mxu0 0
        %1149 = vmatpush1.bf16.msra.mxu0 %v1125
        %1150 = vmatprep.subr.bf16.mxu0 0
        %1151 = vmatpush1.bf16.msra.mxu0 0
        %1152 = vmatprep.subr.bf16.mxu0 0
        %1153 = vmatpush1.bf16.msra.mxu0 0
        %1154 = vmatprep.subr.bf16.mxu0 0
        %1155 = vmatpush1.bf16.msra.mxu0 0
        %1156 = vmatprep.subr.bf16.mxu0 0
        %1157 = vmatpush1.bf16.msra.mxu0 0
        %1158 = vmatprep.subr.bf16.mxu0 0
        %1159 = vmatpush1.bf16.msra.mxu0 0
        %1160 = vmatprep.subr.bf16.mxu0 0
        %1161 = vmatpush1.bf16.msra.mxu0 0
        %1162 = vmatprep.subr.bf16.mxu0 0
        %1163 = vmatpush1.bf16.msra.mxu0 0
        %1164 = vmatprep.subr.bf16.mxu0 0
        %1165 = vmatpush1.bf16.msra.mxu0 0
        %1166 = vmatprep.mubr.bf16.mxu0 0
        %1167 = vmatmul.mubr.bf16.gmra.mrb[0].mxu0 %v956
        %v1168 = vpop.f32.mrb[0].mxu0
        %v1169 = vadd.f32 %v1081, %v1168
        %v1170 = vpop.f32.mrb[0].mxu0
        %v1171 = vpop.f32.mrb[0].mxu0
        %v1172 = vpop.f32.mrb[0].mxu0
        %1173 = vdwg.mxu0
        %s1174 = scalar_lea.vmem [#allocation9], 128
        %v1175 = vld [vmem:[%s1174] sm:$0xf]
        %v1176 = vld [vmem:[%s1174 + $0x4] sm:$0xf]
        %v1177 = vld [vmem:[%s1174 + $0x8] sm:$0xf]
        %v1178 = vld [vmem:[%s1174 + $0xc] sm:$0xf]
        %v1179 = vld [vmem:[%s1174 + $0x10] sm:$0xf]
        %v1180 = vld [vmem:[%s1174 + $0x14] sm:$0xf]
        %v1181 = vld [vmem:[%s1174 + $0x18] sm:$0xf]
        %v1182 = vld [vmem:[%s1174 + $0x1c] sm:$0xf]
        %v1183 = vld [vmem:[%s1174 + $0x20] sm:$0xf]
        %v1184 = vld [vmem:[%s1174 + $0x24] sm:$0xf]
        %v1185 = vld [vmem:[%s1174 + $0x28] sm:$0xf]
        %v1186 = vld [vmem:[%s1174 + $0x2c] sm:$0xf]
        %v1187 = vld [vmem:[%s1174 + $0x30] sm:$0xf]
        %v1188 = vld [vmem:[%s1174 + $0x34] sm:$0xf]
        %v1189 = vld [vmem:[%s1174 + $0x38] sm:$0xf]
        %v1190 = vld [vmem:[%s1174 + $0x3c] sm:$0xf]
        %v1192 = vrot.slane %v956, 1
        %v1210 = vunpack.c.l.b16 %v1175
        %v1211 = vunpack.c.l.b16 %v1176
        %v1212 = vunpack.c.l.b16 %v1177
        %v1213 = vunpack.c.l.b16 %v1178
        %v1214 = vunpack.c.l.b16 %v1179
        %v1215 = vunpack.c.l.b16 %v1180
        %v1216 = vunpack.c.l.b16 %v1181
        %v1217 = vunpack.c.l.b16 %v1182
        %v1218 = vunpack.c.l.b16 %v1183
        %v1219 = vunpack.c.l.b16 %v1184
        %v1220 = vunpack.c.l.b16 %v1185
        %v1221 = vunpack.c.l.b16 %v1186
        %v1222 = vunpack.c.l.b16 %v1187
        %v1223 = vunpack.c.l.b16 %v1188
        %v1224 = vunpack.c.l.b16 %v1189
        %v1225 = vunpack.c.l.b16 %v1190
        %v1226 = vpack.c.b16 %v1211, %v1210
        %v1227 = vpack.c.b16 %v1213, %v1212
        %v1228 = vpack.c.b16 %v1215, %v1214
        %v1229 = vpack.c.b16 %v1217, %v1216
        %v1230 = vpack.c.b16 %v1219, %v1218
        %v1231 = vpack.c.b16 %v1221, %v1220
        %v1232 = vpack.c.b16 %v1223, %v1222
        %v1233 = vpack.c.b16 %v1225, %v1224
        %1242 = vmatprep.subr.bf16.mxu0 0
        %1243 = vmatpush1.bf16.msra.mxu0 %v1226
        %1244 = vmatprep.subr.bf16.mxu0 0
        %1245 = vmatpush1.bf16.msra.mxu0 %v1227
        %1246 = vmatprep.subr.bf16.mxu0 0
        %1247 = vmatpush1.bf16.msra.mxu0 %v1228
        %1248 = vmatprep.subr.bf16.mxu0 0
        %1249 = vmatpush1.bf16.msra.mxu0 %v1229
        %1250 = vmatprep.subr.bf16.mxu0 0
        %1251 = vmatpush1.bf16.msra.mxu0 %v1230
        %1252 = vmatprep.subr.bf16.mxu0 0
        %1253 = vmatpush1.bf16.msra.mxu0 %v1231
        %1254 = vmatprep.subr.bf16.mxu0 0
        %1255 = vmatpush1.bf16.msra.mxu0 %v1232
        %1256 = vmatprep.subr.bf16.mxu0 0
        %1257 = vmatpush1.bf16.msra.mxu0 %v1233
        %1258 = vmatprep.subr.bf16.mxu0 0
        %1259 = vmatpush1.bf16.msra.mxu0 0
        %1260 = vmatprep.subr.bf16.mxu0 0
        %1261 = vmatpush1.bf16.msra.mxu0 0
        %1262 = vmatprep.subr.bf16.mxu0 0
        %1263 = vmatpush1.bf16.msra.mxu0 0
        %1264 = vmatprep.subr.bf16.mxu0 0
        %1265 = vmatpush1.bf16.msra.mxu0 0
        %1266 = vmatprep.subr.bf16.mxu0 0
        %1267 = vmatpush1.bf16.msra.mxu0 0
        %1268 = vmatprep.subr.bf16.mxu0 0
        %1269 = vmatpush1.bf16.msra.mxu0 0
        %1270 = vmatprep.subr.bf16.mxu0 0
        %1271 = vmatpush1.bf16.msra.mxu0 0
        %1272 = vmatprep.subr.bf16.mxu0 0
        %1273 = vmatpush1.bf16.msra.mxu0 0
        %1274 = vmatprep.mubr.bf16.mxu0 0
        %1275 = vmatmul.mubr.bf16.gmra.mrb[0].mxu0 %v1192
        %v1276 = vpop.f32.mrb[0].mxu0
        %v1277 = vadd.f32 0.0, %v1276
        %v1278 = vpop.f32.mrb[0].mxu0
        %v1279 = vpop.f32.mrb[0].mxu0
        %v1280 = vpop.f32.mrb[0].mxu0
        %1281 = vdwg.mxu0
        %v1282 = vadd.f32 %v1169, %v1277
        %s1283 = scalar_lea.vmem [#allocation9], 192
        %v1284 = vld [vmem:[%s1283] sm:$0xf]
        %v1285 = vld [vmem:[%s1283 + $0x4] sm:$0xf]
        %v1286 = vld [vmem:[%s1283 + $0x8] sm:$0xf]
        %v1287 = vld [vmem:[%s1283 + $0xc] sm:$0xf]
        %v1288 = vld [vmem:[%s1283 + $0x10] sm:$0xf]
        %v1289 = vld [vmem:[%s1283 + $0x14] sm:$0xf]
        %v1290 = vld [vmem:[%s1283 + $0x18] sm:$0xf]
        %v1291 = vld [vmem:[%s1283 + $0x1c] sm:$0xf]
        %v1292 = vld [vmem:[%s1283 + $0x20] sm:$0xf]
        %v1293 = vld [vmem:[%s1283 + $0x24] sm:$0xf]
        %v1294 = vld [vmem:[%s1283 + $0x28] sm:$0xf]
        %v1295 = vld [vmem:[%s1283 + $0x2c] sm:$0xf]
        %v1296 = vld [vmem:[%s1283 + $0x30] sm:$0xf]
        %v1297 = vld [vmem:[%s1283 + $0x34] sm:$0xf]
        %v1298 = vld [vmem:[%s1283 + $0x38] sm:$0xf]
        %v1299 = vld [vmem:[%s1283 + $0x3c] sm:$0xf]
        %v1300 = vrot.slane %v991, 1
        %v1301 = vrot.slane %v993, 2
        %v1302 = vor.u32 %v1300, %v1301
        %v1320 = vunpack.c.l.b16 %v1284
        %v1321 = vunpack.c.l.b16 %v1285
        %v1322 = vunpack.c.l.b16 %v1286
        %v1323 = vunpack.c.l.b16 %v1287
        %v1324 = vunpack.c.l.b16 %v1288
        %v1325 = vunpack.c.l.b16 %v1289
        %v1326 = vunpack.c.l.b16 %v1290
        %v1327 = vunpack.c.l.b16 %v1291
        %v1328 = vunpack.c.l.b16 %v1292
        %v1329 = vunpack.c.l.b16 %v1293
        %v1330 = vunpack.c.l.b16 %v1294
        %v1331 = vunpack.c.l.b16 %v1295
        %v1332 = vunpack.c.l.b16 %v1296
        %v1333 = vunpack.c.l.b16 %v1297
        %v1334 = vunpack.c.l.b16 %v1298
        %v1335 = vunpack.c.l.b16 %v1299
        %v1336 = vpack.c.b16 %v1321, %v1320
        %v1337 = vpack.c.b16 %v1323, %v1322
        %v1338 = vpack.c.b16 %v1325, %v1324
        %v1339 = vpack.c.b16 %v1327, %v1326
        %v1340 = vpack.c.b16 %v1329, %v1328
        %v1341 = vpack.c.b16 %v1331, %v1330
        %v1342 = vpack.c.b16 %v1333, %v1332
        %v1343 = vpack.c.b16 %v1335, %v1334
        %1352 = vmatprep.subr.bf16.mxu0 0
        %1353 = vmatpush1.bf16.msra.mxu0 %v1336
        %1354 = vmatprep.subr.bf16.mxu0 0
        %1355 = vmatpush1.bf16.msra.mxu0 %v1337
        %1356 = vmatprep.subr.bf16.mxu0 0
        %1357 = vmatpush1.bf16.msra.mxu0 %v1338
        %1358 = vmatprep.subr.bf16.mxu0 0
        %1359 = vmatpush1.bf16.msra.mxu0 %v1339
        %1360 = vmatprep.subr.bf16.mxu0 0
        %1361 = vmatpush1.bf16.msra.mxu0 %v1340
        %1362 = vmatprep.subr.bf16.mxu0 0
        %1363 = vmatpush1.bf16.msra.mxu0 %v1341
        %1364 = vmatprep.subr.bf16.mxu0 0
        %1365 = vmatpush1.bf16.msra.mxu0 %v1342
        %1366 = vmatprep.subr.bf16.mxu0 0
        %1367 = vmatpush1.bf16.msra.mxu0 %v1343
        %1368 = vmatprep.subr.bf16.mxu0 0
        %1369 = vmatpush1.bf16.msra.mxu0 0
        %1370 = vmatprep.subr.bf16.mxu0 0
        %1371 = vmatpush1.bf16.msra.mxu0 0
        %1372 = vmatprep.subr.bf16.mxu0 0
        %1373 = vmatpush1.bf16.msra.mxu0 0
        %1374 = vmatprep.subr.bf16.mxu0 0
        %1375 = vmatpush1.bf16.msra.mxu0 0
        %1376 = vmatprep.subr.bf16.mxu0 0
        %1377 = vmatpush1.bf16.msra.mxu0 0
        %1378 = vmatprep.subr.bf16.mxu0 0
        %1379 = vmatpush1.bf16.msra.mxu0 0
        %1380 = vmatprep.subr.bf16.mxu0 0
        %1381 = vmatpush1.bf16.msra.mxu0 0
        %1382 = vmatprep.subr.bf16.mxu0 0
        %1383 = vmatpush1.bf16.msra.mxu0 0
        %1384 = vmatprep.mubr.bf16.mxu0 0
        %1385 = vmatmul.mubr.bf16.gmra.mrb[0].mxu0 %v1302
        %v1386 = vpop.f32.mrb[0].mxu0
        %v1387 = vadd.f32 0.0, %v1386
        %v1388 = vpop.f32.mrb[0].mxu0
        %v1389 = vpop.f32.mrb[0].mxu0
        %v1390 = vpop.f32.mrb[0].mxu0
        %1391 = vdwg.mxu0
        %v1392 = vadd.f32 %v1282, %v1387
        %s1393 = scalar_lea.vmem [#allocation9], 256
        %v1394 = vld [vmem:[%s1393] sm:$0xf]
        %v1395 = vld [vmem:[%s1393 + $0x4] sm:$0xf]
        %v1396 = vld [vmem:[%s1393 + $0x8] sm:$0xf]
        %v1397 = vld [vmem:[%s1393 + $0xc] sm:$0xf]
        %v1398 = vld [vmem:[%s1393 + $0x10] sm:$0xf]
        %v1399 = vld [vmem:[%s1393 + $0x14] sm:$0xf]
        %v1400 = vld [vmem:[%s1393 + $0x18] sm:$0xf]
        %v1401 = vld [vmem:[%s1393 + $0x1c] sm:$0xf]
        %v1402 = vld [vmem:[%s1393 + $0x20] sm:$0xf]
        %v1403 = vld [vmem:[%s1393 + $0x24] sm:$0xf]
        %v1404 = vld [vmem:[%s1393 + $0x28] sm:$0xf]
        %v1405 = vld [vmem:[%s1393 + $0x2c] sm:$0xf]
        %v1406 = vld [vmem:[%s1393 + $0x30] sm:$0xf]
        %v1407 = vld [vmem:[%s1393 + $0x34] sm:$0xf]
        %v1408 = vld [vmem:[%s1393 + $0x38] sm:$0xf]
        %v1409 = vld [vmem:[%s1393 + $0x3c] sm:$0xf]
        %v1410 = vrot.slane %v956, 2
        %v1428 = vunpack.c.l.b16 %v1394
        %v1429 = vunpack.c.l.b16 %v1395
        %v1430 = vunpack.c.l.b16 %v1396
        %v1431 = vunpack.c.l.b16 %v1397
        %v1432 = vunpack.c.l.b16 %v1398
        %v1433 = vunpack.c.l.b16 %v1399
        %v1434 = vunpack.c.l.b16 %v1400
        %v1435 = vunpack.c.l.b16 %v1401
        %v1436 = vunpack.c.l.b16 %v1402
        %v1437 = vunpack.c.l.b16 %v1403
        %v1438 = vunpack.c.l.b16 %v1404
        %v1439 = vunpack.c.l.b16 %v1405
        %v1440 = vunpack.c.l.b16 %v1406
        %v1441 = vunpack.c.l.b16 %v1407
        %v1442 = vunpack.c.l.b16 %v1408
        %v1443 = vunpack.c.l.b16 %v1409
        %v1444 = vpack.c.b16 %v1429, %v1428
        %v1445 = vpack.c.b16 %v1431, %v1430
        %v1446 = vpack.c.b16 %v1433, %v1432
        %v1447 = vpack.c.b16 %v1435, %v1434
        %v1448 = vpack.c.b16 %v1437, %v1436
        %v1449 = vpack.c.b16 %v1439, %v1438
        %v1450 = vpack.c.b16 %v1441, %v1440
        %v1451 = vpack.c.b16 %v1443, %v1442
        %1460 = vmatprep.subr.bf16.mxu0 0
        %1461 = vmatpush1.bf16.msra.mxu0 %v1444
        %1462 = vmatprep.subr.bf16.mxu0 0
        %1463 = vmatpush1.bf16.msra.mxu0 %v1445
        %1464 = vmatprep.subr.bf16.mxu0 0
        %1465 = vmatpush1.bf16.msra.mxu0 %v1446
        %1466 = vmatprep.subr.bf16.mxu0 0
        %1467 = vmatpush1.bf16.msra.mxu0 %v1447
        %1468 = vmatprep.subr.bf16.mxu0 0
        %1469 = vmatpush1.bf16.msra.mxu0 %v1448
        %1470 = vmatprep.subr.bf16.mxu0 0
        %1471 = vmatpush1.bf16.msra.mxu0 %v1449
        %1472 = vmatprep.subr.bf16.mxu0 0
        %1473 = vmatpush1.bf16.msra.mxu0 %v1450
        %1474 = vmatprep.subr.bf16.mxu0 0
        %1475 = vmatpush1.bf16.msra.mxu0 %v1451
        %1476 = vmatprep.subr.bf16.mxu0 0
        %1477 = vmatpush1.bf16.msra.mxu0 0
        %1478 = vmatprep.subr.bf16.mxu0 0
        %1479 = vmatpush1.bf16.msra.mxu0 0
        %1480 = vmatprep.subr.bf16.mxu0 0
        %1481 = vmatpush1.bf16.msra.mxu0 0
        %1482 = vmatprep.subr.bf16.mxu0 0
        %1483 = vmatpush1.bf16.msra.mxu0 0
        %1484 = vmatprep.subr.bf16.mxu0 0
        %1485 = vmatpush1.bf16.msra.mxu0 0
        %1486 = vmatprep.subr.bf16.mxu0 0
        %1487 = vmatpush1.bf16.msra.mxu0 0
        %1488 = vmatprep.subr.bf16.mxu0 0
        %1489 = vmatpush1.bf16.msra.mxu0 0
        %1490 = vmatprep.subr.bf16.mxu0 0
        %1491 = vmatpush1.bf16.msra.mxu0 0
        %1492 = vmatprep.mubr.bf16.mxu0 0
        %1493 = vmatmul.mubr.bf16.gmra.mrb[0].mxu0 %v1410
        %v1494 = vpop.f32.mrb[0].mxu0
        %v1495 = vadd.f32 0.0, %v1494
        %v1496 = vpop.f32.mrb[0].mxu0
        %v1497 = vpop.f32.mrb[0].mxu0
        %v1498 = vpop.f32.mrb[0].mxu0
        %1499 = vdwg.mxu0
        %v1500 = vadd.f32 %v1392, %v1495
        %v1501 = vld [vmem:[%s5] sm:$0x1]
        %v1503 = vlaneseq
        %v1504 = vshrl.u32 %v1503, 7
        %v1505 = vsub.s32 0, %v1504
        %v1506 = vrot.slane %v1501, %v1505
        %v1508 = vadd.f32 %v1500, %v1506
        %v1509 = vmul.f32 %v1508, %v387
        %v1511 = vrot.slane %v1509, 4
        %v1513 = vadd.f32 %v349, %v1511
        %v1514 = vadd.f32 %v350, %v1511
        %vm1515 = vcmask 1047556
        %v1516 = vsel %vm1515, %v1513, 0.0
        %1517 = vadd.xlane.f32.xlu0 %v1516
        %v1518 = vpop.xlane.xlu0 %1517
        %vm1519 = vcmask 1043456
        %v1520 = vsel %vm1519, %v1514, 0.0
        %1521 = vadd.xlane.f32.xlu0 %v1520
        %v1522 = vpop.xlane.xlu0 %1521
        %v1523 = vmul.f32 %v1518, 0.25
        %v1524 = vmul.f32 %v1522, 0.25
        %v1525 = vsub.f32 %v1513, %v1523
        %v1526 = vsub.f32 %v1514, %v1524
        %v1527 = vlaneseq
        %v1528 = vand.u32 %v1527, 127
        %vm1529 = vcmp.lt.s32.totalorder %v1528, 4
        %v1530 = vsel %vm1529, 1, 0
        %v1531 = vcvt.s32.f32 %v1530
        %v1532 = vmul.f32 %v1525, %v1531
        %v1533 = vmul.f32 %v1526, %v1531
        %v1534 = vmul.f32 %v1532, %v1532
        %v1535 = vmul.f32 %v1533, %v1533
        %v1536 = vsel %vm1515, %v1534, 0.0
        %1537 = vadd.xlane.f32.xlu0 %v1536
        %v1538 = vpop.xlane.xlu0 %1537
        %v1539 = vsel %vm1519, %v1535, 0.0
        %1540 = vadd.xlane.f32.xlu0 %v1539
        %v1541 = vpop.xlane.xlu0 %1540
        %v1542 = vmul.f32 %v1538, 0.25
        %v1543 = vmul.f32 %v1541, 0.25
        %v1544 = vadd.f32 %v1542, 1e-05
        %v1545 = vadd.f32 %v1543, 1e-05
        %v1546 = vrsqrt.pop %v1544
        %v1547 = vrsqrt.pop %v1545
        %v1548 = vmul.f32 %v1532, %v1546
        %v1549 = vmul.f32 %v1533, %v1547
        %v1550 = vld [vmem:[%s6] sm:$0x1]
        %v1552 = vlaneseq
        %v1553 = vshrl.u32 %v1552, 7
        %v1554 = vsub.s32 0, %v1553
        %v1555 = vrot.slane %v1550, %v1554
        %v1557 = vmul.f32 %v1548, %v1555
        %v1558 = vmul.f32 %v1549, %v1555
        %v1559 = vld [vmem:[%s7] sm:$0x1]
        %v1561 = vlaneseq
        %v1562 = vshrl.u32 %v1561, 7
        %v1563 = vsub.s32 0, %v1562
        %v1564 = vrot.slane %v1559, %v1563
        %v1566 = vadd.f32 %v1557, %v1564
        %v1567 = vadd.f32 %v1558, %v1564
        %v1569 = vrot.slane %v387, 4
        %v1571 = vmul.f32 %v1566, %v1569
        %v1572 = vmul.f32 %v1567, %v1569
        %1573 = vst [vmem:[%s344 - $0x4] sm:$0xf0] %v1571
        %1574 = vst [vmem:[%s344 + $0x4] sm:$0xf] %v1572
        %s1575 = sand.u32 %s204, 1
        %s1576 = scalar_lea.sflag [#allocation6], %s1575
        %s1577 = sand.u32 %s204, 1
        %s1578 = smul.addr %s1577, 8
        %s1579 = scalar_lea.vmem [#allocation10], %s1578
        // Predicated region
        $region61: #{tpu_custom_call.1} parent=47 // pred_check
          %p1580 = pneg %p214
        $region62: #{tpu_custom_call.1} parent=47 // pred_check_branch
          %1582 = sbr.rel (%p1580) target = $region64
        $region63: #{tpu_custom_call.1} parent=47 // pred_region
          %s1584 = ssub.s32 128, 128
          %1585 = vsyncadd %s1576, %s1584
          %s1586 = smul.addr %s34, 2
          %s1587 = sadd.s32 %s35, %s1586
          %s1588 = smul.addr %s1587, 128
          %s1589 = scalar_lea.hbm %s8, %s1588
          %s1591 = sshll.u32 %s1579, 4
          %s1592 = int_to_ptr.vmem [resolvable:$true] %s1591
          %1594 = dma.vmem_to_hbm [thread:$0]  %s1592, 128, %s1589, %s1576
        $region64: #{tpu_custom_call.1} parent=47 // pred_fallthru
          _
      $region48: #{tpu_custom_call.1} parent=5 // pred_fallthru
        _
      %p1595 = scmp.le.s32.totalorder 2, %s25
      // Predicated region
      $region65: #{tpu_custom_call.1} parent=5 // pred_check
        %p1596 = pneg %p1595
      $region66: #{tpu_custom_call.1} parent=5 // pred_check_branch
        %1598 = sbr.rel (%p1596) target = $region68
      $region67: #{tpu_custom_call.1} parent=5 // pred_region
        %s1599 = ssub.s32 %s25, 2
        // Predicated region
        $region69: #{tpu_custom_call.1} parent=67 // pred_check
          %p1600 = pneg %p220
        $region70: #{tpu_custom_call.1} parent=67 // pred_check_branch
          %1602 = sbr.rel (%p1600) target = $region72
        $region71: #{tpu_custom_call.1} parent=67 // pred_region
          %s1603 = sand.u32 %s205, 1
          %s1604 = scalar_lea.sflag [#allocation6], %s1603
          %s1605 = sand.u32 %s205, 1
          %s1606 = smul.addr %s1605, 8
          %s1607 = scalar_lea.vmem [#allocation10], %s1606
          %1608 = dma.done %s1604, 128
        $region72: #{tpu_custom_call.1} parent=67 // pred_fallthru
          _
      $region68: #{tpu_custom_call.1} parent=5 // pred_fallthru
        _
    $region6: #{tpu_custom_call.1} parent=1 // loop_footer
      %s29 = sadd.s32 1, %s25
    $region7: #{tpu_custom_call.1} parent=1 // loop_footer_branch
      %24 = sbr.rel target = $region3
    $region8: #{tpu_custom_call.1} parent=1 // loop_exit
      _
    %1609 = vsyncpa [#allocation5], 1
    %s1610 = scalar_lea.sflag [#allocation5], 1
    %1611 = vsyncpa %s1610, 1
    %1612 = vsyncpa [#allocation8], 1
    %1613 = vsyncpa [#allocation6], 1
    %s1614 = scalar_lea.sflag [#allocation6], 1
    %1615 = vsyncpa %s1614, 1

</llo_original>
